<compile_context>
chip_gen: v7x
topology: tpu7x:2x2x1
jax: 0.10.0
libtpu: 0.0.40
codegen_flags: <defaults>
</compile_context>

<pallas_src>
import jax
import jax.numpy as jnp
from jax.experimental import pallas as pl
from jax.experimental.pallas import tpu as pltpu


def ibnet_kernel(feat_ref, w13_ref, b13_ref, w2_ref, b2_ref, w4_ref, b4_ref,
                 out_ref):
    n_feats, N, D = feat_ref.shape
    n_stages = n_feats - 1

    # Vector partial accumulated across the (statically unrolled) stages; one
    # scalar reduction at the very end.
    acc = jnp.zeros((N, D), jnp.float32)

    for s in range(n_stages):
        fs = feat_ref[s + 1]            # [N, D]  student feature (input to head)
        fr = feat_ref[s]                # [N, D]  reference feature

        # Fused layer 1 (w13 = [w1 | w3], pre-fused once at init): one
        # lane-dense [N, D] @ [D, 2D] matmul -> [h_mu | h_v].
        h = jnp.maximum(
            jnp.dot(fs, w13_ref[s], preferred_element_type=jnp.float32)
            + b13_ref[s], 0.0)                                   # [N, 2D]
        h_mu = h[:, :D]
        h_v = h[:, D:]

        # Layer 2: two small matmuls (no block-diagonal zero padding DMA'd).
        mu = (jnp.dot(h_mu, w2_ref[s], preferred_element_type=jnp.float32)
              + b2_ref[s])                                       # [N, D]
        pre_var = (jnp.dot(h_v, w4_ref[s], preferred_element_type=jnp.float32)
                   + b4_ref[s])                                  # [N, D]
        var = jax.nn.sigmoid(pre_var) * 0.1 + 1e-6               # [N, D]

        # j-leading pairwise |fr_j - mu_i| so the mean over j is a plain
        # leading-axis (VALU) reduce of N tiles, not an XLU sublane reduce.
        mean_neg = jnp.mean(jnp.abs(fr[:, None, :] - mu[None, :, :]),
                            axis=0)                              # [N(i), D]
        diag = jnp.abs(mu - fr)                                  # [N, D]

        # (positive - negative) contribution, exact division for correctness.
        acc = acc + (mean_neg - diag) / var

    # upper_bound = sum over stages of mean_i sum_d (...)  ==  sum(acc) / N
    out_ref[0, 0] = jnp.sum(acc) * (1.0 / N)


def fuse_ibnet_params(params):
    """One-time weight fusion. Call at parameter init/update time, NOT per forward."""
    return {
        "w13": jnp.concatenate([params["w1"], params["w3"]], axis=-1),  # [3, D, 2D]
        "b13": jnp.concatenate([params["b1"], params["b3"]], axis=-1),  # [3, 1, 2D]
        "w2": params["w2"],   # [3, D, D]
        "b2": params["b2"],   # [3, 1, D]
        "w4": params["w4"],   # [3, D, D]
        "b4": params["b4"],   # [3, 1, D]
    }


def ibnet_forward(feat, fused):
    """feat: [4, N, D] stacked student features; fused: fuse_ibnet_params(...) output."""
    vmem = pl.BlockSpec(memory_space=pltpu.MemorySpace.VMEM)
    out = pl.pallas_call(
        ibnet_kernel,
        out_shape=jax.ShapeDtypeStruct((1, 1), jnp.float32),
        in_specs=[vmem] * 7,
        out_specs=pl.BlockSpec(memory_space=pltpu.MemorySpace.SMEM),
    )(feat, fused["w13"], fused["b13"], fused["w2"], fused["b2"],
      fused["w4"], fused["b4"])
    return out[0, 0]


def ibnet_reference(fea_stu, params):
    """Pure-JAX reference mirroring the PyTorch forward (un-fused heads)."""
    hp = jax.lax.Precision.HIGHEST
    upper_bound = 0.0
    for idx in range(1, 4):
        f_s, f_r = fea_stu[idx], fea_stu[idx - 1]
        k = idx - 1
        h_mu = jnp.maximum(
            jnp.dot(f_s, params["w1"][k], precision=hp) + params["b1"][k][0], 0.0)
        mu = jnp.dot(h_mu, params["w2"][k], precision=hp) + params["b2"][k][0]
        h_v = jnp.maximum(
            jnp.dot(f_s, params["w3"][k], precision=hp) + params["b3"][k][0], 0.0)
        var = jax.nn.sigmoid(
            jnp.dot(h_v, params["w4"][k], precision=hp) + params["b4"][k][0])
        var = var * 0.1 + 1e-6
        positive = -jnp.abs(mu - f_r) / var
        negative = -jnp.mean(jnp.abs(f_r[None, :, :] - mu[:, None, :]), axis=1) / var
        upper_bound += jnp.mean(positive.sum(-1) - negative.sum(-1))
    return upper_bound


def make_params(key, nf, n_stages=3):
    ks = jax.random.split(key, 8)
    scale = 1.0 / jnp.sqrt(nf)
    params = {
        "w1": jax.random.normal(ks[0], (n_stages, nf, nf), jnp.float32) * scale,
        "b1": jax.random.normal(ks[1], (n_stages, 1, nf), jnp.float32) * 0.01,
        "w2": jax.random.normal(ks[2], (n_stages, nf, nf), jnp.float32) * scale,
        "b2": jax.random.normal(ks[3], (n_stages, 1, nf), jnp.float32) * 0.01,
        "w3": jax.random.normal(ks[4], (n_stages, nf, nf), jnp.float32) * scale,
        "b3": jax.random.normal(ks[5], (n_stages, 1, nf), jnp.float32) * 0.01,
        "w4": jax.random.normal(ks[6], (n_stages, nf, nf), jnp.float32) * scale,
        "b4": jax.random.normal(ks[7], (n_stages, 1, nf), jnp.float32) * 0.01,
    }
    return params


if __name__ == "__main__":
    N, nf = 8, 64
    key = jax.random.PRNGKey(0)
    kp, kf = jax.random.split(key)
    params = make_params(kp, nf)

    feat_keys = jax.random.split(kf, 4)
    fea_stu = [jax.random.normal(feat_keys[i], (N, nf), jnp.float32)
               for i in range(4)]

    # One-time, out-of-the-forward-path fusion (hoisted per perf feedback).
    fused = jax.tree_util.tree_map(jax.block_until_ready, fuse_ibnet_params(params))
    feat = jnp.stack(fea_stu, axis=0)   # [4, N, D]

    out = ibnet_forward(feat, fused)
    out = jax.block_until_ready(out)

    ref = ibnet_reference(fea_stu, params)
    assert jnp.allclose(out, ref, rtol=1e-3, atol=1e-3), (out, ref)

    print("KERNEL_OK")
</pallas_src>

<mosaic_0001>
module attributes {stable_mosaic.version = 11 : i64} {
  func.func @ibnet_kernel(%arg0: memref<4x8x64xf32, #tpu.memory_space<vmem>>, %arg1: memref<3x64x128xf32, #tpu.memory_space<vmem>>, %arg2: memref<3x1x128xf32, #tpu.memory_space<vmem>>, %arg3: memref<3x64x64xf32, #tpu.memory_space<vmem>>, %arg4: memref<3x1x64xf32, #tpu.memory_space<vmem>>, %arg5: memref<3x64x64xf32, #tpu.memory_space<vmem>>, %arg6: memref<3x1x64xf32, #tpu.memory_space<vmem>>, %arg7: memref<1x1xf32, #tpu.memory_space<smem>>) attributes {dimension_semantics = [], scalar_prefetch = 0 : i64, scratch_operands = 0 : i64, tpu.core_type = #tpu.core_type<tc>} {
    %cst = arith.constant 0.000000e+00 : f32
    %0 = vector.broadcast %cst : f32 to vector<8x64xf32>
    %c1 = arith.constant 1 : index
    %c0 = arith.constant 0 : index
    %c0_0 = arith.constant 0 : index
    %1 = vector.load %arg0[%c1, %c0, %c0_0] : memref<4x8x64xf32, #tpu.memory_space<vmem>>, vector<1x8x64xf32>
    %2 = vector.shape_cast %1 : vector<1x8x64xf32> to vector<8x64xf32>
    %c0_1 = arith.constant 0 : index
    %c0_2 = arith.constant 0 : index
    %c0_3 = arith.constant 0 : index
    %3 = vector.load %arg0[%c0_1, %c0_2, %c0_3] : memref<4x8x64xf32, #tpu.memory_space<vmem>>, vector<1x8x64xf32>
    %4 = vector.shape_cast %3 : vector<1x8x64xf32> to vector<8x64xf32>
    %c0_4 = arith.constant 0 : index
    %c0_5 = arith.constant 0 : index
    %c0_6 = arith.constant 0 : index
    %5 = vector.load %arg1[%c0_4, %c0_5, %c0_6] : memref<3x64x128xf32, #tpu.memory_space<vmem>>, vector<1x64x128xf32>
    %6 = vector.shape_cast %5 : vector<1x64x128xf32> to vector<64x128xf32>
    %cst_7 = arith.constant dense<0.000000e+00> : vector<8x128xf32>
    %7 = tpu.matmul %2, %6, %cst_7 {dimension_numbers = #tpu.dot_dimension_numbers<[1], [0], [0], [1], [0, 0, 1, 1], [], []>} : vector<8x64xf32>, vector<64x128xf32>, vector<8x128xf32> -> vector<8x128xf32>
    %c0_8 = arith.constant 0 : index
    %c0_9 = arith.constant 0 : index
    %c0_10 = arith.constant 0 : index
    %8 = vector.load %arg2[%c0_8, %c0_9, %c0_10] : memref<3x1x128xf32, #tpu.memory_space<vmem>>, vector<1x1x128xf32>
    %9 = vector.shape_cast %8 : vector<1x1x128xf32> to vector<1x128xf32>
    %10 = vector.broadcast %9 : vector<1x128xf32> to vector<8x128xf32>
    %11 = arith.addf %7, %10 : vector<8x128xf32>
    %cst_11 = arith.constant 0.000000e+00 : f32
    %12 = vector.broadcast %cst_11 : f32 to vector<8x128xf32>
    %13 = arith.maximumf %11, %12 : vector<8x128xf32>
    %14 = vector.extract_strided_slice %13 {offsets = [0, 0], sizes = [8, 64], strides = [1, 1]} : vector<8x128xf32> to vector<8x64xf32>
    %15 = vector.extract_strided_slice %13 {offsets = [0, 64], sizes = [8, 64], strides = [1, 1]} : vector<8x128xf32> to vector<8x64xf32>
    %c0_12 = arith.constant 0 : index
    %c0_13 = arith.constant 0 : index
    %c0_14 = arith.constant 0 : index
    %16 = vector.load %arg3[%c0_12, %c0_13, %c0_14] : memref<3x64x64xf32, #tpu.memory_space<vmem>>, vector<1x64x64xf32>
    %17 = vector.shape_cast %16 : vector<1x64x64xf32> to vector<64x64xf32>
    %cst_15 = arith.constant dense<0.000000e+00> : vector<8x64xf32>
    %18 = tpu.matmul %14, %17, %cst_15 {dimension_numbers = #tpu.dot_dimension_numbers<[1], [0], [0], [1], [0, 0, 1, 1], [], []>} : vector<8x64xf32>, vector<64x64xf32>, vector<8x64xf32> -> vector<8x64xf32>
    %c0_16 = arith.constant 0 : index
    %c0_17 = arith.constant 0 : index
    %c0_18 = arith.constant 0 : index
    %19 = vector.load %arg4[%c0_16, %c0_17, %c0_18] : memref<3x1x64xf32, #tpu.memory_space<vmem>>, vector<1x1x64xf32>
    %20 = vector.shape_cast %19 : vector<1x1x64xf32> to vector<1x64xf32>
    %21 = vector.broadcast %20 : vector<1x64xf32> to vector<8x64xf32>
    %22 = arith.addf %18, %21 : vector<8x64xf32>
    %c0_19 = arith.constant 0 : index
    %c0_20 = arith.constant 0 : index
    %c0_21 = arith.constant 0 : index
    %23 = vector.load %arg5[%c0_19, %c0_20, %c0_21] : memref<3x64x64xf32, #tpu.memory_space<vmem>>, vector<1x64x64xf32>
    %24 = vector.shape_cast %23 : vector<1x64x64xf32> to vector<64x64xf32>
    %cst_22 = arith.constant dense<0.000000e+00> : vector<8x64xf32>
    %25 = tpu.matmul %15, %24, %cst_22 {dimension_numbers = #tpu.dot_dimension_numbers<[1], [0], [0], [1], [0, 0, 1, 1], [], []>} : vector<8x64xf32>, vector<64x64xf32>, vector<8x64xf32> -> vector<8x64xf32>
    %c0_23 = arith.constant 0 : index
    %c0_24 = arith.constant 0 : index
    %c0_25 = arith.constant 0 : index
    %26 = vector.load %arg6[%c0_23, %c0_24, %c0_25] : memref<3x1x64xf32, #tpu.memory_space<vmem>>, vector<1x1x64xf32>
    %27 = vector.shape_cast %26 : vector<1x1x64xf32> to vector<1x64xf32>
    %28 = vector.broadcast %27 : vector<1x64xf32> to vector<8x64xf32>
    %29 = arith.addf %25, %28 : vector<8x64xf32>
    %30 = arith.negf %29 : vector<8x64xf32>
    %31 = math.exp %30 : vector<8x64xf32>
    %cst_26 = arith.constant 1.000000e+00 : f32
    %32 = vector.broadcast %cst_26 : f32 to vector<8x64xf32>
    %33 = arith.addf %32, %31 : vector<8x64xf32>
    %34 = arith.divf %32, %33 : vector<8x64xf32>
    %cst_27 = arith.constant 1.000000e-01 : f32
    %35 = vector.broadcast %cst_27 : f32 to vector<8x64xf32>
    %36 = arith.mulf %34, %35 : vector<8x64xf32>
    %cst_28 = arith.constant 9.99999997E-7 : f32
    %37 = vector.broadcast %cst_28 : f32 to vector<8x64xf32>
    %38 = arith.addf %36, %37 : vector<8x64xf32>
    %39 = vector.shape_cast %4 : vector<8x64xf32> to vector<8x1x64xf32>
    %40 = vector.shape_cast %22 : vector<8x64xf32> to vector<1x8x64xf32>
    %41 = vector.broadcast %39 : vector<8x1x64xf32> to vector<8x8x64xf32>
    %42 = vector.broadcast %40 : vector<1x8x64xf32> to vector<8x8x64xf32>
    %43 = arith.subf %41, %42 : vector<8x8x64xf32>
    %44 = math.absf %43 : vector<8x8x64xf32>
    %cst_29 = arith.constant dense<0.000000e+00> : vector<8x64xf32>
    %45 = vector.multi_reduction <add>, %44, %cst_29 [0] : vector<8x8x64xf32> to vector<8x64xf32>
    %cst_30 = arith.constant 8.000000e+00 : f32
    %46 = vector.broadcast %cst_30 : f32 to vector<8x64xf32>
    %47 = arith.divf %45, %46 : vector<8x64xf32>
    %48 = arith.subf %22, %4 : vector<8x64xf32>
    %49 = math.absf %48 : vector<8x64xf32>
    %50 = arith.subf %47, %49 : vector<8x64xf32>
    %51 = arith.divf %50, %38 : vector<8x64xf32>
    %52 = arith.addf %0, %51 : vector<8x64xf32>
    %c2 = arith.constant 2 : index
    %c0_31 = arith.constant 0 : index
    %c0_32 = arith.constant 0 : index
    %53 = vector.load %arg0[%c2, %c0_31, %c0_32] : memref<4x8x64xf32, #tpu.memory_space<vmem>>, vector<1x8x64xf32>
    %54 = vector.shape_cast %53 : vector<1x8x64xf32> to vector<8x64xf32>
    %c1_33 = arith.constant 1 : index
    %c0_34 = arith.constant 0 : index
    %c0_35 = arith.constant 0 : index
    %55 = vector.load %arg0[%c1_33, %c0_34, %c0_35] : memref<4x8x64xf32, #tpu.memory_space<vmem>>, vector<1x8x64xf32>
    %56 = vector.shape_cast %55 : vector<1x8x64xf32> to vector<8x64xf32>
    %c1_36 = arith.constant 1 : index
    %c0_37 = arith.constant 0 : index
    %c0_38 = arith.constant 0 : index
    %57 = vector.load %arg1[%c1_36, %c0_37, %c0_38] : memref<3x64x128xf32, #tpu.memory_space<vmem>>, vector<1x64x128xf32>
    %58 = vector.shape_cast %57 : vector<1x64x128xf32> to vector<64x128xf32>
    %cst_39 = arith.constant dense<0.000000e+00> : vector<8x128xf32>
    %59 = tpu.matmul %54, %58, %cst_39 {dimension_numbers = #tpu.dot_dimension_numbers<[1], [0], [0], [1], [0, 0, 1, 1], [], []>} : vector<8x64xf32>, vector<64x128xf32>, vector<8x128xf32> -> vector<8x128xf32>
    %c1_40 = arith.constant 1 : index
    %c0_41 = arith.constant 0 : index
    %c0_42 = arith.constant 0 : index
    %60 = vector.load %arg2[%c1_40, %c0_41, %c0_42] : memref<3x1x128xf32, #tpu.memory_space<vmem>>, vector<1x1x128xf32>
    %61 = vector.shape_cast %60 : vector<1x1x128xf32> to vector<1x128xf32>
    %62 = vector.broadcast %61 : vector<1x128xf32> to vector<8x128xf32>
    %63 = arith.addf %59, %62 : vector<8x128xf32>
    %cst_43 = arith.constant 0.000000e+00 : f32
    %64 = vector.broadcast %cst_43 : f32 to vector<8x128xf32>
    %65 = arith.maximumf %63, %64 : vector<8x128xf32>
    %66 = vector.extract_strided_slice %65 {offsets = [0, 0], sizes = [8, 64], strides = [1, 1]} : vector<8x128xf32> to vector<8x64xf32>
    %67 = vector.extract_strided_slice %65 {offsets = [0, 64], sizes = [8, 64], strides = [1, 1]} : vector<8x128xf32> to vector<8x64xf32>
    %c1_44 = arith.constant 1 : index
    %c0_45 = arith.constant 0 : index
    %c0_46 = arith.constant 0 : index
    %68 = vector.load %arg3[%c1_44, %c0_45, %c0_46] : memref<3x64x64xf32, #tpu.memory_space<vmem>>, vector<1x64x64xf32>
    %69 = vector.shape_cast %68 : vector<1x64x64xf32> to vector<64x64xf32>
    %cst_47 = arith.constant dense<0.000000e+00> : vector<8x64xf32>
    %70 = tpu.matmul %66, %69, %cst_47 {dimension_numbers = #tpu.dot_dimension_numbers<[1], [0], [0], [1], [0, 0, 1, 1], [], []>} : vector<8x64xf32>, vector<64x64xf32>, vector<8x64xf32> -> vector<8x64xf32>
    %c1_48 = arith.constant 1 : index
    %c0_49 = arith.constant 0 : index
    %c0_50 = arith.constant 0 : index
    %71 = vector.load %arg4[%c1_48, %c0_49, %c0_50] : memref<3x1x64xf32, #tpu.memory_space<vmem>>, vector<1x1x64xf32>
    %72 = vector.shape_cast %71 : vector<1x1x64xf32> to vector<1x64xf32>
    %73 = vector.broadcast %72 : vector<1x64xf32> to vector<8x64xf32>
    %74 = arith.addf %70, %73 : vector<8x64xf32>
    %c1_51 = arith.constant 1 : index
    %c0_52 = arith.constant 0 : index
    %c0_53 = arith.constant 0 : index
    %75 = vector.load %arg5[%c1_51, %c0_52, %c0_53] : memref<3x64x64xf32, #tpu.memory_space<vmem>>, vector<1x64x64xf32>
    %76 = vector.shape_cast %75 : vector<1x64x64xf32> to vector<64x64xf32>
    %cst_54 = arith.constant dense<0.000000e+00> : vector<8x64xf32>
    %77 = tpu.matmul %67, %76, %cst_54 {dimension_numbers = #tpu.dot_dimension_numbers<[1], [0], [0], [1], [0, 0, 1, 1], [], []>} : vector<8x64xf32>, vector<64x64xf32>, vector<8x64xf32> -> vector<8x64xf32>
    %c1_55 = arith.constant 1 : index
    %c0_56 = arith.constant 0 : index
    %c0_57 = arith.constant 0 : index
    %78 = vector.load %arg6[%c1_55, %c0_56, %c0_57] : memref<3x1x64xf32, #tpu.memory_space<vmem>>, vector<1x1x64xf32>
    %79 = vector.shape_cast %78 : vector<1x1x64xf32> to vector<1x64xf32>
    %80 = vector.broadcast %79 : vector<1x64xf32> to vector<8x64xf32>
    %81 = arith.addf %77, %80 : vector<8x64xf32>
    %82 = arith.negf %81 : vector<8x64xf32>
    %83 = math.exp %82 : vector<8x64xf32>
    %cst_58 = arith.constant 1.000000e+00 : f32
    %84 = vector.broadcast %cst_58 : f32 to vector<8x64xf32>
    %85 = arith.addf %84, %83 : vector<8x64xf32>
    %86 = arith.divf %84, %85 : vector<8x64xf32>
    %cst_59 = arith.constant 1.000000e-01 : f32
    %87 = vector.broadcast %cst_59 : f32 to vector<8x64xf32>
    %88 = arith.mulf %86, %87 : vector<8x64xf32>
    %cst_60 = arith.constant 9.99999997E-7 : f32
    %89 = vector.broadcast %cst_60 : f32 to vector<8x64xf32>
    %90 = arith.addf %88, %89 : vector<8x64xf32>
    %91 = vector.shape_cast %56 : vector<8x64xf32> to vector<8x1x64xf32>
    %92 = vector.shape_cast %74 : vector<8x64xf32> to vector<1x8x64xf32>
    %93 = vector.broadcast %91 : vector<8x1x64xf32> to vector<8x8x64xf32>
    %94 = vector.broadcast %92 : vector<1x8x64xf32> to vector<8x8x64xf32>
    %95 = arith.subf %93, %94 : vector<8x8x64xf32>
    %96 = math.absf %95 : vector<8x8x64xf32>
    %cst_61 = arith.constant dense<0.000000e+00> : vector<8x64xf32>
    %97 = vector.multi_reduction <add>, %96, %cst_61 [0] : vector<8x8x64xf32> to vector<8x64xf32>
    %cst_62 = arith.constant 8.000000e+00 : f32
    %98 = vector.broadcast %cst_62 : f32 to vector<8x64xf32>
    %99 = arith.divf %97, %98 : vector<8x64xf32>
    %100 = arith.subf %74, %56 : vector<8x64xf32>
    %101 = math.absf %100 : vector<8x64xf32>
    %102 = arith.subf %99, %101 : vector<8x64xf32>
    %103 = arith.divf %102, %90 : vector<8x64xf32>
    %104 = arith.addf %52, %103 : vector<8x64xf32>
    %c3 = arith.constant 3 : index
    %c0_63 = arith.constant 0 : index
    %c0_64 = arith.constant 0 : index
    %105 = vector.load %arg0[%c3, %c0_63, %c0_64] : memref<4x8x64xf32, #tpu.memory_space<vmem>>, vector<1x8x64xf32>
    %106 = vector.shape_cast %105 : vector<1x8x64xf32> to vector<8x64xf32>
    %c2_65 = arith.constant 2 : index
    %c0_66 = arith.constant 0 : index
    %c0_67 = arith.constant 0 : index
    %107 = vector.load %arg0[%c2_65, %c0_66, %c0_67] : memref<4x8x64xf32, #tpu.memory_space<vmem>>, vector<1x8x64xf32>
    %108 = vector.shape_cast %107 : vector<1x8x64xf32> to vector<8x64xf32>
    %c2_68 = arith.constant 2 : index
    %c0_69 = arith.constant 0 : index
    %c0_70 = arith.constant 0 : index
    %109 = vector.load %arg1[%c2_68, %c0_69, %c0_70] : memref<3x64x128xf32, #tpu.memory_space<vmem>>, vector<1x64x128xf32>
    %110 = vector.shape_cast %109 : vector<1x64x128xf32> to vector<64x128xf32>
    %cst_71 = arith.constant dense<0.000000e+00> : vector<8x128xf32>
    %111 = tpu.matmul %106, %110, %cst_71 {dimension_numbers = #tpu.dot_dimension_numbers<[1], [0], [0], [1], [0, 0, 1, 1], [], []>} : vector<8x64xf32>, vector<64x128xf32>, vector<8x128xf32> -> vector<8x128xf32>
    %c2_72 = arith.constant 2 : index
    %c0_73 = arith.constant 0 : index
    %c0_74 = arith.constant 0 : index
    %112 = vector.load %arg2[%c2_72, %c0_73, %c0_74] : memref<3x1x128xf32, #tpu.memory_space<vmem>>, vector<1x1x128xf32>
    %113 = vector.shape_cast %112 : vector<1x1x128xf32> to vector<1x128xf32>
    %114 = vector.broadcast %113 : vector<1x128xf32> to vector<8x128xf32>
    %115 = arith.addf %111, %114 : vector<8x128xf32>
    %cst_75 = arith.constant 0.000000e+00 : f32
    %116 = vector.broadcast %cst_75 : f32 to vector<8x128xf32>
    %117 = arith.maximumf %115, %116 : vector<8x128xf32>
    %118 = vector.extract_strided_slice %117 {offsets = [0, 0], sizes = [8, 64], strides = [1, 1]} : vector<8x128xf32> to vector<8x64xf32>
    %119 = vector.extract_strided_slice %117 {offsets = [0, 64], sizes = [8, 64], strides = [1, 1]} : vector<8x128xf32> to vector<8x64xf32>
    %c2_76 = arith.constant 2 : index
    %c0_77 = arith.constant 0 : index
    %c0_78 = arith.constant 0 : index
    %120 = vector.load %arg3[%c2_76, %c0_77, %c0_78] : memref<3x64x64xf32, #tpu.memory_space<vmem>>, vector<1x64x64xf32>
    %121 = vector.shape_cast %120 : vector<1x64x64xf32> to vector<64x64xf32>
    %cst_79 = arith.constant dense<0.000000e+00> : vector<8x64xf32>
    %122 = tpu.matmul %118, %121, %cst_79 {dimension_numbers = #tpu.dot_dimension_numbers<[1], [0], [0], [1], [0, 0, 1, 1], [], []>} : vector<8x64xf32>, vector<64x64xf32>, vector<8x64xf32> -> vector<8x64xf32>
    %c2_80 = arith.constant 2 : index
    %c0_81 = arith.constant 0 : index
    %c0_82 = arith.constant 0 : index
    %123 = vector.load %arg4[%c2_80, %c0_81, %c0_82] : memref<3x1x64xf32, #tpu.memory_space<vmem>>, vector<1x1x64xf32>
    %124 = vector.shape_cast %123 : vector<1x1x64xf32> to vector<1x64xf32>
    %125 = vector.broadcast %124 : vector<1x64xf32> to vector<8x64xf32>
    %126 = arith.addf %122, %125 : vector<8x64xf32>
    %c2_83 = arith.constant 2 : index
    %c0_84 = arith.constant 0 : index
    %c0_85 = arith.constant 0 : index
    %127 = vector.load %arg5[%c2_83, %c0_84, %c0_85] : memref<3x64x64xf32, #tpu.memory_space<vmem>>, vector<1x64x64xf32>
    %128 = vector.shape_cast %127 : vector<1x64x64xf32> to vector<64x64xf32>
    %cst_86 = arith.constant dense<0.000000e+00> : vector<8x64xf32>
    %129 = tpu.matmul %119, %128, %cst_86 {dimension_numbers = #tpu.dot_dimension_numbers<[1], [0], [0], [1], [0, 0, 1, 1], [], []>} : vector<8x64xf32>, vector<64x64xf32>, vector<8x64xf32> -> vector<8x64xf32>
    %c2_87 = arith.constant 2 : index
    %c0_88 = arith.constant 0 : index
    %c0_89 = arith.constant 0 : index
    %130 = vector.load %arg6[%c2_87, %c0_88, %c0_89] : memref<3x1x64xf32, #tpu.memory_space<vmem>>, vector<1x1x64xf32>
    %131 = vector.shape_cast %130 : vector<1x1x64xf32> to vector<1x64xf32>
    %132 = vector.broadcast %131 : vector<1x64xf32> to vector<8x64xf32>
    %133 = arith.addf %129, %132 : vector<8x64xf32>
    %134 = arith.negf %133 : vector<8x64xf32>
    %135 = math.exp %134 : vector<8x64xf32>
    %cst_90 = arith.constant 1.000000e+00 : f32
    %136 = vector.broadcast %cst_90 : f32 to vector<8x64xf32>
    %137 = arith.addf %136, %135 : vector<8x64xf32>
    %138 = arith.divf %136, %137 : vector<8x64xf32>
    %cst_91 = arith.constant 1.000000e-01 : f32
    %139 = vector.broadcast %cst_91 : f32 to vector<8x64xf32>
    %140 = arith.mulf %138, %139 : vector<8x64xf32>
    %cst_92 = arith.constant 9.99999997E-7 : f32
    %141 = vector.broadcast %cst_92 : f32 to vector<8x64xf32>
    %142 = arith.addf %140, %141 : vector<8x64xf32>
    %143 = vector.shape_cast %108 : vector<8x64xf32> to vector<8x1x64xf32>
    %144 = vector.shape_cast %126 : vector<8x64xf32> to vector<1x8x64xf32>
    %145 = vector.broadcast %143 : vector<8x1x64xf32> to vector<8x8x64xf32>
    %146 = vector.broadcast %144 : vector<1x8x64xf32> to vector<8x8x64xf32>
    %147 = arith.subf %145, %146 : vector<8x8x64xf32>
    %148 = math.absf %147 : vector<8x8x64xf32>
    %cst_93 = arith.constant dense<0.000000e+00> : vector<8x64xf32>
    %149 = vector.multi_reduction <add>, %148, %cst_93 [0] : vector<8x8x64xf32> to vector<8x64xf32>
    %cst_94 = arith.constant 8.000000e+00 : f32
    %150 = vector.broadcast %cst_94 : f32 to vector<8x64xf32>
    %151 = arith.divf %149, %150 : vector<8x64xf32>
    %152 = arith.subf %126, %108 : vector<8x64xf32>
    %153 = math.absf %152 : vector<8x64xf32>
    %154 = arith.subf %151, %153 : vector<8x64xf32>
    %155 = arith.divf %154, %142 : vector<8x64xf32>
    %156 = arith.addf %104, %155 : vector<8x64xf32>
    %157 = vector.shape_cast %156 : vector<8x64xf32> to vector<1x8x64xf32>
    %cst_95 = arith.constant dense<0.000000e+00> : vector<1xf32>
    %158 = vector.multi_reduction <add>, %157, %cst_95 [1, 2] : vector<1x8x64xf32> to vector<1xf32>
    %159 = vector.shape_cast %158 : vector<1xf32> to vector<1x1x1xf32>
    %160 = vector.extract %159[0, 0, 0] : f32 from vector<1x1x1xf32>
    %cst_96 = arith.constant 1.250000e-01 : f32
    %161 = arith.mulf %160, %cst_96 : f32
    %c0_97 = arith.constant 0 : index
    %c0_98 = arith.constant 0 : index
    %162 = memref.load %arg7[%c0_97, %c0_98] : memref<1x1xf32, #tpu.memory_space<smem>>
    memref.store %161, %arg7[%c0_97, %c0_98] : memref<1x1xf32, #tpu.memory_space<smem>>
    return
  }
}

</mosaic_0001>

<llo_original>
// kernel: tpu_custom_call.1
$region0: #{tpu_custom_call.1}
  #allocation0 [shape = 'u32[]', space=smem, size = 0x4, offset = 0x4, fixed_abs, tag = 'smem constant byte address 0x4 - core index']
  #allocation1 [shape = 'u32[144,128]{1,0:T(1,128)}', space=vmem, size = 0x12000, scoped, tag = 'internal scratch']
  %s0 = inlined_call_operand.hbm [shape: f32[4,8,64], index: 0, kind: input, shape index: {}]
  %s1 = inlined_call_operand.hbm [shape: f32[3,64,128], index: 1, kind: input, shape index: {}]
  %s2 = inlined_call_operand.vmem [shape: f32[3,1,128], index: 2, kind: input, shape index: {}]
  %s3 = inlined_call_operand.hbm [shape: f32[3,64,64], index: 3, kind: input, shape index: {}]
  %s4 = inlined_call_operand.vmem [shape: f32[3,1,64], index: 4, kind: input, shape index: {}]
  %s5 = inlined_call_operand.hbm [shape: f32[3,64,64], index: 5, kind: input, shape index: {}]
  %s6 = inlined_call_operand.vmem [shape: f32[3,1,64], index: 6, kind: input, shape index: {}]
  %s7 = inlined_call_operand.hbm [shape: f32[1,1], index: 7, kind: output, shape index: {}]
  %s8 = sld [smem:[#allocation0]]
  $region54: #{tpu_custom_call.1} parent=0
    _
  %s10 = ssub.s32 1, %s8
  %s11 = scalar_select 0, %s10, %s8
  $region1: #{tpu_custom_call.1} parent=0
    #allocation2 [shape = 'u8[16384]{0}', space=vmem, size = 0x4000, scoped, tag = 'input window, operand 0, single buffered']
    #allocation3 [shape = 's32[1]{0}', space=sflag, size = 0x4, scoped, tag = 'scoped memory for tpu_custom_call.1']
    #allocation4 [shape = 's32[1]{0}', space=sflag, size = 0x4, scoped, tag = 'scoped memory for tpu_custom_call.1']
    #allocation5 [shape = 'u8[98304]{0}', space=vmem, size = 0x18000, scoped, tag = 'input window, operand 1, single buffered']
    #allocation6 [shape = 's32[1]{0}', space=sflag, size = 0x4, scoped, tag = 'scoped memory for tpu_custom_call.1']
    #allocation7 [shape = 'u8[98304]{0}', space=vmem, size = 0x18000, scoped, tag = 'input window, operand 3, single buffered']
    #allocation8 [shape = 'u8[98304]{0}', space=vmem, size = 0x18000, scoped, tag = 'input window, operand 5, single buffered']
    #allocation9 [shape = 's32[1]{0}', space=sflag, size = 0x4, scoped, tag = 'scoped memory for tpu_custom_call.1']
    #allocation10 [shape = 'u8[512]{0}', space=smem, size = 0x200, scoped, tag = 'output window, operand 0, single buffered']
    %12 = vsyncpa [#allocation3], 0
    %13 = vsyncpa [#allocation6], 0
    %14 = vsyncpa [#allocation9], 0
    %15 = vsyncpa [#allocation4], 0
    // Predicated region
    $region2: #{tpu_custom_call.1} parent=1 // pred_check
      _
    $region3: #{tpu_custom_call.1} parent=1 // pred_check_branch
      %17 = sbr.rel (0) target = $region5
    $region4: #{tpu_custom_call.1} parent=1 // pred_region
      %s19 = ssub.s32 512, 512
      %20 = vsyncadd [#allocation3], %s19
      %s21 = sshll.u32 [#allocation2], 4
      %s22 = int_to_ptr.vmem [resolvable:$true] %s21
      %27 = dma.hbm_to_vmem [thread:$0]  %s0, 512, %s22, [#allocation3], 128, 128, 8
    $region5: #{tpu_custom_call.1} parent=1 // pred_fallthru
      _
    // Predicated region
    $region6: #{tpu_custom_call.1} parent=1 // pred_check
      _
    $region7: #{tpu_custom_call.1} parent=1 // pred_check_branch
      %29 = sbr.rel (0) target = $region9
    $region8: #{tpu_custom_call.1} parent=1 // pred_region
      %s31 = ssub.s32 3072, 3072
      %32 = vsyncadd [#allocation6], %s31
      %s33 = sshll.u32 [#allocation5], 4
      %s34 = int_to_ptr.vmem [resolvable:$true] %s33
      %39 = dma.hbm_to_vmem [thread:$0]  %s1, 3072, %s34, [#allocation6], 128, 128, 8
    $region9: #{tpu_custom_call.1} parent=1 // pred_fallthru
      _
    // Predicated region
    $region10: #{tpu_custom_call.1} parent=1 // pred_check
      _
    $region11: #{tpu_custom_call.1} parent=1 // pred_check_branch
      %41 = sbr.rel (0) target = $region13
    $region12: #{tpu_custom_call.1} parent=1 // pred_region
      _
    $region13: #{tpu_custom_call.1} parent=1 // pred_fallthru
      _
    // Predicated region
    $region14: #{tpu_custom_call.1} parent=1 // pred_check
      _
    $region15: #{tpu_custom_call.1} parent=1 // pred_check_branch
      %43 = sbr.rel (0) target = $region17
    $region16: #{tpu_custom_call.1} parent=1 // pred_region
      %s45 = ssub.s32 3072, 3072
      %46 = vsyncadd [#allocation6], %s45
      %s47 = sshll.u32 [#allocation7], 4
      %s48 = int_to_ptr.vmem [resolvable:$true] %s47
      %53 = dma.hbm_to_vmem [thread:$0]  %s3, 3072, %s48, [#allocation6], 128, 128, 8
    $region17: #{tpu_custom_call.1} parent=1 // pred_fallthru
      _
    // Predicated region
    $region18: #{tpu_custom_call.1} parent=1 // pred_check
      _
    $region19: #{tpu_custom_call.1} parent=1 // pred_check_branch
      %55 = sbr.rel (0) target = $region21
    $region20: #{tpu_custom_call.1} parent=1 // pred_region
      _
    $region21: #{tpu_custom_call.1} parent=1 // pred_fallthru
      _
    // Predicated region
    $region22: #{tpu_custom_call.1} parent=1 // pred_check
      _
    $region23: #{tpu_custom_call.1} parent=1 // pred_check_branch
      %57 = sbr.rel (0) target = $region25
    $region24: #{tpu_custom_call.1} parent=1 // pred_region
      %s59 = ssub.s32 3072, 3072
      %60 = vsyncadd [#allocation9], %s59
      %s61 = sshll.u32 [#allocation8], 4
      %s62 = int_to_ptr.vmem [resolvable:$true] %s61
      %67 = dma.hbm_to_vmem [thread:$0]  %s5, 3072, %s62, [#allocation9], 128, 128, 8
    $region25: #{tpu_custom_call.1} parent=1 // pred_fallthru
      _
    // Predicated region
    $region26: #{tpu_custom_call.1} parent=1 // pred_check
      _
    $region27: #{tpu_custom_call.1} parent=1 // pred_check_branch
      %69 = sbr.rel (0) target = $region29
    $region28: #{tpu_custom_call.1} parent=1 // pred_region
      _
    $region29: #{tpu_custom_call.1} parent=1 // pred_fallthru
      _
    // Predicated region
    $region30: #{tpu_custom_call.1} parent=1 // pred_check
      _
    $region31: #{tpu_custom_call.1} parent=1 // pred_check_branch
      %71 = sbr.rel (0) target = $region33
    $region32: #{tpu_custom_call.1} parent=1 // pred_region
      %72 = dma.done [#allocation3], 512
    $region33: #{tpu_custom_call.1} parent=1 // pred_fallthru
      _
    // Predicated region
    $region34: #{tpu_custom_call.1} parent=1 // pred_check
      _
    $region35: #{tpu_custom_call.1} parent=1 // pred_check_branch
      %74 = sbr.rel (0) target = $region37
    $region36: #{tpu_custom_call.1} parent=1 // pred_region
      %75 = dma.done [#allocation6], 3072
    $region37: #{tpu_custom_call.1} parent=1 // pred_fallthru
      _
    // Predicated region
    $region38: #{tpu_custom_call.1} parent=1 // pred_check
      _
    $region39: #{tpu_custom_call.1} parent=1 // pred_check_branch
      %77 = sbr.rel (0) target = $region41
    $region40: #{tpu_custom_call.1} parent=1 // pred_region
      %78 = dma.done [#allocation6], 3072
    $region41: #{tpu_custom_call.1} parent=1 // pred_fallthru
      _
    // Predicated region
    $region42: #{tpu_custom_call.1} parent=1 // pred_check
      _
    $region43: #{tpu_custom_call.1} parent=1 // pred_check_branch
      %80 = sbr.rel (0) target = $region45
    $region44: #{tpu_custom_call.1} parent=1 // pred_region
      %81 = dma.done [#allocation9], 3072
    $region45: #{tpu_custom_call.1} parent=1 // pred_fallthru
      _
    %s82 = scalar_lea.vmem [#allocation2], 8
    %v83 = vld [vmem:[%s82] sm:$0xff]
    %v84 = vld [vmem:[#allocation2] sm:$0xff]
    %v85 = vld [vmem:[#allocation5] sm:$0xff]
    %v86 = vld [vmem:[#allocation5 + $0x8] sm:$0xff]
    %v87 = vld [vmem:[#allocation5 + $0x10] sm:$0xff]
    %v88 = vld [vmem:[#allocation5 + $0x18] sm:$0xff]
    %v89 = vld [vmem:[#allocation5 + $0x20] sm:$0xff]
    %v90 = vld [vmem:[#allocation5 + $0x28] sm:$0xff]
    %v91 = vld [vmem:[#allocation5 + $0x30] sm:$0xff]
    %v92 = vld [vmem:[#allocation5 + $0x38] sm:$0xff]
    %v93 = vld [vmem:[%s2] sm:$0x1]
    %v95 = vlaneseq
    %v96 = vshrl.u32 %v95, 7
    %v97 = vsub.s32 0, %v96
    %v98 = vrot.slane %v93, %v97
    %vm100 = vcmask 523264
    %v102 = vsel %vm100, %v83, 0
    %104 = vmatprep.subr.mxu0 0.0
    %105 = vmatpush1.msra.mxu0 %v85
    %106 = vmatprep.subr.mxu0 0.0
    %107 = vmatpush1.msra.mxu0 %v86
    %108 = vmatprep.subr.mxu0 0.0
    %109 = vmatpush1.msra.mxu0 %v87
    %110 = vmatprep.subr.mxu0 0.0
    %111 = vmatpush1.msra.mxu0 %v88
    %112 = vmatprep.subr.mxu0 0.0
    %113 = vmatpush1.msra.mxu0 %v89
    %114 = vmatprep.subr.mxu0 0.0
    %115 = vmatpush1.msra.mxu0 %v90
    %116 = vmatprep.subr.mxu0 0.0
    %117 = vmatpush1.msra.mxu0 %v91
    %118 = vmatprep.subr.mxu0 0.0
    %119 = vmatpush1.msra.mxu0 %v92
    %120 = vmatprep.subr.mxu0 0.0
    %121 = vmatpush1.msra.mxu0 0.0
    %122 = vmatprep.subr.mxu0 0.0
    %123 = vmatpush1.msra.mxu0 0.0
    %124 = vmatprep.subr.mxu0 0.0
    %125 = vmatpush1.msra.mxu0 0.0
    %126 = vmatprep.subr.mxu0 0.0
    %127 = vmatpush1.msra.mxu0 0.0
    %128 = vmatprep.subr.mxu0 0.0
    %129 = vmatpush1.msra.mxu0 0.0
    %130 = vmatprep.subr.mxu0 0.0
    %131 = vmatpush1.msra.mxu0 0.0
    %132 = vmatprep.subr.mxu0 0.0
    %133 = vmatpush1.msra.mxu0 0.0
    %134 = vmatprep.subr.mxu0 0.0
    %135 = vmatpush1.msra.mxu0 0.0
    %136 = vmatprep.subr.mxu0 0.0
    %137 = vmatpush1.msra.mxu0 0.0
    %138 = vmatprep.subr.mxu0 0.0
    %139 = vmatpush1.msra.mxu0 0.0
    %140 = vmatprep.subr.mxu0 0.0
    %141 = vmatpush1.msra.mxu0 0.0
    %142 = vmatprep.subr.mxu0 0.0
    %143 = vmatpush1.msra.mxu0 0.0
    %144 = vmatprep.subr.mxu0 0.0
    %145 = vmatpush1.msra.mxu0 0.0
    %146 = vmatprep.subr.mxu0 0.0
    %147 = vmatpush1.msra.mxu0 0.0
    %148 = vmatprep.subr.mxu0 0.0
    %149 = vmatpush1.msra.mxu0 0.0
    %150 = vmatprep.subr.mxu0 0.0
    %151 = vmatpush1.msra.mxu0 0.0
    %152 = vmatprep.subr.mxu0 0.0
    %153 = vmatpush1.msra.mxu0 0.0
    %154 = vmatprep.subr.mxu0 0.0
    %155 = vmatpush1.msra.mxu0 0.0
    %156 = vmatprep.subr.mxu0 0.0
    %157 = vmatpush1.msra.mxu0 0.0
    %158 = vmatprep.subr.mxu0 0.0
    %159 = vmatpush1.msra.mxu0 0.0
    %160 = vmatprep.subr.mxu0 0.0
    %161 = vmatpush1.msra.mxu0 0.0
    %162 = vmatprep.subr.mxu0 0.0
    %163 = vmatpush1.msra.mxu0 0.0
    %164 = vmatprep.subr.mxu0 0.0
    %165 = vmatpush1.msra.mxu0 0.0
    %166 = vmatprep.subr.mxu0 0.0
    %167 = vmatpush1.msra.mxu0 0.0
    %168 = vmatprep.mubr.f32.mxu0 0.0
    %169 = vmatmul.mubr.f32.gmra.mrb[0].mxu0 %v102
    %v170 = vpop.f32.mrb[0].mxu0
    %v171 = vadd.f32 %v98, %v170
    %v172 = vpop.f32.mrb[0].mxu0
    %173 = vdwg.mxu0
    %v174 = vmax.f32 %v171, 0.0
    %v175 = vld [vmem:[#allocation7] sm:$0xff]
    %v176 = vld [vmem:[#allocation7 + $0x8] sm:$0xff]
    %v177 = vld [vmem:[#allocation7 + $0x10] sm:$0xff]
    %v178 = vld [vmem:[#allocation7 + $0x18] sm:$0xff]
    %v179 = vld [vmem:[#allocation7 + $0x20] sm:$0xff]
    %v180 = vld [vmem:[#allocation7 + $0x28] sm:$0xff]
    %v181 = vld [vmem:[#allocation7 + $0x30] sm:$0xff]
    %v182 = vld [vmem:[#allocation7 + $0x38] sm:$0xff]
    %v183 = vld [vmem:[%s4] sm:$0x1]
    %v185 = vlaneseq
    %v186 = vshrl.u32 %v185, 7
    %v187 = vsub.s32 0, %v186
    %v188 = vrot.slane %v183, %v187
    %v191 = vsel %vm100, %v174, 0
    %193 = vmatprep.subr.mxu0 0.0
    %194 = vmatpush1.msra.mxu0 %v175
    %195 = vmatprep.subr.mxu0 0.0
    %196 = vmatpush1.msra.mxu0 %v176
    %197 = vmatprep.subr.mxu0 0.0
    %198 = vmatpush1.msra.mxu0 %v177
    %199 = vmatprep.subr.mxu0 0.0
    %200 = vmatpush1.msra.mxu0 %v178
    %201 = vmatprep.subr.mxu0 0.0
    %202 = vmatpush1.msra.mxu0 %v179
    %203 = vmatprep.subr.mxu0 0.0
    %204 = vmatpush1.msra.mxu0 %v180
    %205 = vmatprep.subr.mxu0 0.0
    %206 = vmatpush1.msra.mxu0 %v181
    %207 = vmatprep.subr.mxu0 0.0
    %208 = vmatpush1.msra.mxu0 %v182
    %209 = vmatprep.subr.mxu0 0.0
    %210 = vmatpush1.msra.mxu0 0.0
    %211 = vmatprep.subr.mxu0 0.0
    %212 = vmatpush1.msra.mxu0 0.0
    %213 = vmatprep.subr.mxu0 0.0
    %214 = vmatpush1.msra.mxu0 0.0
    %215 = vmatprep.subr.mxu0 0.0
    %216 = vmatpush1.msra.mxu0 0.0
    %217 = vmatprep.subr.mxu0 0.0
    %218 = vmatpush1.msra.mxu0 0.0
    %219 = vmatprep.subr.mxu0 0.0
    %220 = vmatpush1.msra.mxu0 0.0
    %221 = vmatprep.subr.mxu0 0.0
    %222 = vmatpush1.msra.mxu0 0.0
    %223 = vmatprep.subr.mxu0 0.0
    %224 = vmatpush1.msra.mxu0 0.0
    %225 = vmatprep.subr.mxu0 0.0
    %226 = vmatpush1.msra.mxu0 0.0
    %227 = vmatprep.subr.mxu0 0.0
    %228 = vmatpush1.msra.mxu0 0.0
    %229 = vmatprep.subr.mxu0 0.0
    %230 = vmatpush1.msra.mxu0 0.0
    %231 = vmatprep.subr.mxu0 0.0
    %232 = vmatpush1.msra.mxu0 0.0
    %233 = vmatprep.subr.mxu0 0.0
    %234 = vmatpush1.msra.mxu0 0.0
    %235 = vmatprep.subr.mxu0 0.0
    %236 = vmatpush1.msra.mxu0 0.0
    %237 = vmatprep.subr.mxu0 0.0
    %238 = vmatpush1.msra.mxu0 0.0
    %239 = vmatprep.subr.mxu0 0.0
    %240 = vmatpush1.msra.mxu0 0.0
    %241 = vmatprep.subr.mxu0 0.0
    %242 = vmatpush1.msra.mxu0 0.0
    %243 = vmatprep.subr.mxu0 0.0
    %244 = vmatpush1.msra.mxu0 0.0
    %245 = vmatprep.subr.mxu0 0.0
    %246 = vmatpush1.msra.mxu0 0.0
    %247 = vmatprep.subr.mxu0 0.0
    %248 = vmatpush1.msra.mxu0 0.0
    %249 = vmatprep.subr.mxu0 0.0
    %250 = vmatpush1.msra.mxu0 0.0
    %251 = vmatprep.subr.mxu0 0.0
    %252 = vmatpush1.msra.mxu0 0.0
    %253 = vmatprep.subr.mxu0 0.0
    %254 = vmatpush1.msra.mxu0 0.0
    %255 = vmatprep.subr.mxu0 0.0
    %256 = vmatpush1.msra.mxu0 0.0
    %257 = vmatprep.mubr.f32.mxu0 0.0
    %258 = vmatmul.mubr.f32.gmra.mrb[0].mxu0 %v191
    %v259 = vpop.f32.mrb[0].mxu0
    %v260 = vadd.f32 %v188, %v259
    %v261 = vpop.f32.mrb[0].mxu0
    %262 = vdwg.mxu0
    %v263 = vld [vmem:[#allocation8] sm:$0xff]
    %v264 = vld [vmem:[#allocation8 + $0x8] sm:$0xff]
    %v265 = vld [vmem:[#allocation8 + $0x10] sm:$0xff]
    %v266 = vld [vmem:[#allocation8 + $0x18] sm:$0xff]
    %v267 = vld [vmem:[#allocation8 + $0x20] sm:$0xff]
    %v268 = vld [vmem:[#allocation8 + $0x28] sm:$0xff]
    %v269 = vld [vmem:[#allocation8 + $0x30] sm:$0xff]
    %v270 = vld [vmem:[#allocation8 + $0x38] sm:$0xff]
    %v271 = vld [vmem:[%s6] sm:$0x1]
    %v273 = vlaneseq
    %v274 = vshrl.u32 %v273, 7
    %v275 = vsub.s32 0, %v274
    %v276 = vrot.slane %v271, %v275
    %278 = vrot.lane.b32.xlu0 %v174, 64
    %v279 = vpop.permute.xlu0 %278
    %v280 = vsel %vm100, %v279, 0
    %282 = vmatprep.subr.mxu0 0.0
    %283 = vmatpush1.msra.mxu0 %v263
    %284 = vmatprep.subr.mxu0 0.0
    %285 = vmatpush1.msra.mxu0 %v264
    %286 = vmatprep.subr.mxu0 0.0
    %287 = vmatpush1.msra.mxu0 %v265
    %288 = vmatprep.subr.mxu0 0.0
    %289 = vmatpush1.msra.mxu0 %v266
    %290 = vmatprep.subr.mxu0 0.0
    %291 = vmatpush1.msra.mxu0 %v267
    %292 = vmatprep.subr.mxu0 0.0
    %293 = vmatpush1.msra.mxu0 %v268
    %294 = vmatprep.subr.mxu0 0.0
    %295 = vmatpush1.msra.mxu0 %v269
    %296 = vmatprep.subr.mxu0 0.0
    %297 = vmatpush1.msra.mxu0 %v270
    %298 = vmatprep.subr.mxu0 0.0
    %299 = vmatpush1.msra.mxu0 0.0
    %300 = vmatprep.subr.mxu0 0.0
    %301 = vmatpush1.msra.mxu0 0.0
    %302 = vmatprep.subr.mxu0 0.0
    %303 = vmatpush1.msra.mxu0 0.0
    %304 = vmatprep.subr.mxu0 0.0
    %305 = vmatpush1.msra.mxu0 0.0
    %306 = vmatprep.subr.mxu0 0.0
    %307 = vmatpush1.msra.mxu0 0.0
    %308 = vmatprep.subr.mxu0 0.0
    %309 = vmatpush1.msra.mxu0 0.0
    %310 = vmatprep.subr.mxu0 0.0
    %311 = vmatpush1.msra.mxu0 0.0
    %312 = vmatprep.subr.mxu0 0.0
    %313 = vmatpush1.msra.mxu0 0.0
    %314 = vmatprep.subr.mxu0 0.0
    %315 = vmatpush1.msra.mxu0 0.0
    %316 = vmatprep.subr.mxu0 0.0
    %317 = vmatpush1.msra.mxu0 0.0
    %318 = vmatprep.subr.mxu0 0.0
    %319 = vmatpush1.msra.mxu0 0.0
    %320 = vmatprep.subr.mxu0 0.0
    %321 = vmatpush1.msra.mxu0 0.0
    %322 = vmatprep.subr.mxu0 0.0
    %323 = vmatpush1.msra.mxu0 0.0
    %324 = vmatprep.subr.mxu0 0.0
    %325 = vmatpush1.msra.mxu0 0.0
    %326 = vmatprep.subr.mxu0 0.0
    %327 = vmatpush1.msra.mxu0 0.0
    %328 = vmatprep.subr.mxu0 0.0
    %329 = vmatpush1.msra.mxu0 0.0
    %330 = vmatprep.subr.mxu0 0.0
    %331 = vmatpush1.msra.mxu0 0.0
    %332 = vmatprep.subr.mxu0 0.0
    %333 = vmatpush1.msra.mxu0 0.0
    %334 = vmatprep.subr.mxu0 0.0
    %335 = vmatpush1.msra.mxu0 0.0
    %336 = vmatprep.subr.mxu0 0.0
    %337 = vmatpush1.msra.mxu0 0.0
    %338 = vmatprep.subr.mxu0 0.0
    %339 = vmatpush1.msra.mxu0 0.0
    %340 = vmatprep.subr.mxu0 0.0
    %341 = vmatpush1.msra.mxu0 0.0
    %342 = vmatprep.subr.mxu0 0.0
    %343 = vmatpush1.msra.mxu0 0.0
    %344 = vmatprep.subr.mxu0 0.0
    %345 = vmatpush1.msra.mxu0 0.0
    %346 = vmatprep.mubr.f32.mxu0 0.0
    %347 = vmatmul.mubr.f32.gmra.mrb[0].mxu0 %v280
    %v348 = vpop.f32.mrb[0].mxu0
    %v349 = vadd.f32 %v276, %v348
    %v350 = vpop.f32.mrb[0].mxu0
    %351 = vdwg.mxu0
    %v352 = vxor.u32 %v349, 2147483648
    %v353 = vmul.f32 %v352, 1.442695
    %v354 = vpow.pop %v353
    %v355 = vadd.f32 %v354, 1.0
    %v356 = vrcp.pop %v355
    %v357 = vmul.f32 1.0, %v356
    %v358 = vmul.f32 %v357, 0.1
    %v359 = vadd.f32 %v358, 1e-06
    %v361 = vcombine.high %v84, %v84
    %v363 = vunpack.c.l.s4 1966171168
    %v364 = vunpack.c.0.s8 %v363
    %v365 = vlaneseq
    %v366 = vshrl.u32 %v365, 7
    %v367 = vsub.s32 %v364, %v366
    %v368 = vrot.slane %v84, %v367
    %v370 = vunpack.c.l.s4 1966171168
    %v371 = vunpack.c.0.s8 %v370
    %v372 = vlaneseq
    %v373 = vshrl.u32 %v372, 7
    %v374 = vsub.s32 %v371, %v373
    %v375 = vrot.slane %v361, %v374
    %v376 = vcombine.high %v368, %v368
    %v377 = vcombine.high %v375, %v375
    %v379 = vunpack.c.l.s4 1966171168
    %v380 = vunpack.c.0.s8 %v379
    %v381 = vlaneseq
    %v382 = vshrl.u32 %v381, 7
    %v383 = vsub.s32 %v380, %v382
    %v384 = vrot.slane %v368, %v383
    %v386 = vunpack.c.l.s4 1966171168
    %v387 = vunpack.c.0.s8 %v386
    %v388 = vlaneseq
    %v389 = vshrl.u32 %v388, 7
    %v390 = vsub.s32 %v387, %v389
    %v391 = vrot.slane %v375, %v390
    %v393 = vunpack.c.l.s4 1966171168
    %v394 = vunpack.c.0.s8 %v393
    %v395 = vlaneseq
    %v396 = vshrl.u32 %v395, 7
    %v397 = vsub.s32 %v394, %v396
    %v398 = vrot.slane %v376, %v397
    %v400 = vunpack.c.l.s4 1966171168
    %v401 = vunpack.c.0.s8 %v400
    %v402 = vlaneseq
    %v403 = vshrl.u32 %v402, 7
    %v404 = vsub.s32 %v401, %v403
    %v405 = vrot.slane %v377, %v404
    %v406 = vcombine.high %v384, %v384
    %v407 = vcombine.high %v391, %v391
    %v408 = vcombine.high %v398, %v398
    %v409 = vcombine.high %v405, %v405
    %v410 = vlaneseq
    %v411 = vshrl.u32 %v410, 7
    %v412 = vsub.s32 0, %v411
    %v413 = vrot.slane %v384, %v412
    %v414 = vlaneseq
    %v415 = vshrl.u32 %v414, 7
    %v416 = vsub.s32 0, %v415
    %v417 = vrot.slane %v398, %v416
    %v418 = vlaneseq
    %v419 = vshrl.u32 %v418, 7
    %v420 = vsub.s32 0, %v419
    %v421 = vrot.slane %v406, %v420
    %v422 = vlaneseq
    %v423 = vshrl.u32 %v422, 7
    %v424 = vsub.s32 0, %v423
    %v425 = vrot.slane %v408, %v424
    %v426 = vlaneseq
    %v427 = vshrl.u32 %v426, 7
    %v428 = vsub.s32 0, %v427
    %v429 = vrot.slane %v391, %v428
    %v430 = vlaneseq
    %v431 = vshrl.u32 %v430, 7
    %v432 = vsub.s32 0, %v431
    %v433 = vrot.slane %v405, %v432
    %v434 = vlaneseq
    %v435 = vshrl.u32 %v434, 7
    %v436 = vsub.s32 0, %v435
    %v437 = vrot.slane %v407, %v436
    %v438 = vlaneseq
    %v439 = vshrl.u32 %v438, 7
    %v440 = vsub.s32 0, %v439
    %v441 = vrot.slane %v409, %v440
    %v450 = vsub.f32 %v413, %v260
    %v451 = vsub.f32 %v417, %v260
    %v452 = vsub.f32 %v421, %v260
    %v453 = vsub.f32 %v425, %v260
    %v454 = vsub.f32 %v429, %v260
    %v455 = vsub.f32 %v433, %v260
    %v456 = vsub.f32 %v437, %v260
    %v457 = vsub.f32 %v441, %v260
    %v458 = vand.u32 2147483647, %v450
    %v459 = vand.u32 2147483647, %v451
    %v460 = vand.u32 2147483647, %v452
    %v461 = vand.u32 2147483647, %v453
    %v462 = vand.u32 2147483647, %v454
    %v463 = vand.u32 2147483647, %v455
    %v464 = vand.u32 2147483647, %v456
    %v465 = vand.u32 2147483647, %v457
    %v466 = vsel %vm100, %v458, 0.0
    %v467 = vsel %vm100, %v459, 0.0
    %v468 = vadd.f32 %v466, %v467
    %v469 = vsel %vm100, %v460, 0.0
    %v470 = vadd.f32 %v468, %v469
    %v471 = vsel %vm100, %v461, 0.0
    %v472 = vadd.f32 %v470, %v471
    %v473 = vsel %vm100, %v462, 0.0
    %v474 = vadd.f32 %v472, %v473
    %v475 = vsel %vm100, %v463, 0.0
    %v476 = vadd.f32 %v474, %v475
    %v477 = vsel %vm100, %v464, 0.0
    %v478 = vadd.f32 %v476, %v477
    %v479 = vsel %vm100, %v465, 0.0
    %v480 = vadd.f32 %v478, %v479
    %v481 = vrcp.pop 8.0
    %v482 = vmul.f32 %v480, %v481
    %v483 = vsub.f32 %v260, %v84
    %v484 = vand.u32 2147483647, %v483
    %v485 = vsub.f32 %v482, %v484
    %v486 = vrcp.pop %v359
    %v487 = vmul.f32 %v485, %v486
    %v488 = vadd.f32 %v487, 0.0
    %s489 = scalar_lea.vmem [#allocation2], 16
    %v490 = vld [vmem:[%s489] sm:$0xff]
    %s491 = scalar_lea.vmem [#allocation5], 64
    %v492 = vld [vmem:[%s491] sm:$0xff]
    %v493 = vld [vmem:[%s491 + $0x8] sm:$0xff]
    %v494 = vld [vmem:[%s491 + $0x10] sm:$0xff]
    %v495 = vld [vmem:[%s491 + $0x18] sm:$0xff]
    %v496 = vld [vmem:[%s491 + $0x20] sm:$0xff]
    %v497 = vld [vmem:[%s491 + $0x28] sm:$0xff]
    %v498 = vld [vmem:[%s491 + $0x30] sm:$0xff]
    %v499 = vld [vmem:[%s491 + $0x38] sm:$0xff]
    %s500 = scalar_lea.vmem %s2, 1
    %v501 = vld [vmem:[%s500] sm:$0x1]
    %v503 = vlaneseq
    %v504 = vshrl.u32 %v503, 7
    %v505 = vsub.s32 0, %v504
    %v506 = vrot.slane %v501, %v505
    %v509 = vsel %vm100, %v490, 0
    %511 = vmatprep.subr.mxu0 0.0
    %512 = vmatpush1.msra.mxu0 %v492
    %513 = vmatprep.subr.mxu0 0.0
    %514 = vmatpush1.msra.mxu0 %v493
    %515 = vmatprep.subr.mxu0 0.0
    %516 = vmatpush1.msra.mxu0 %v494
    %517 = vmatprep.subr.mxu0 0.0
    %518 = vmatpush1.msra.mxu0 %v495
    %519 = vmatprep.subr.mxu0 0.0
    %520 = vmatpush1.msra.mxu0 %v496
    %521 = vmatprep.subr.mxu0 0.0
    %522 = vmatpush1.msra.mxu0 %v497
    %523 = vmatprep.subr.mxu0 0.0
    %524 = vmatpush1.msra.mxu0 %v498
    %525 = vmatprep.subr.mxu0 0.0
    %526 = vmatpush1.msra.mxu0 %v499
    %527 = vmatprep.subr.mxu0 0.0
    %528 = vmatpush1.msra.mxu0 0.0
    %529 = vmatprep.subr.mxu0 0.0
    %530 = vmatpush1.msra.mxu0 0.0
    %531 = vmatprep.subr.mxu0 0.0
    %532 = vmatpush1.msra.mxu0 0.0
    %533 = vmatprep.subr.mxu0 0.0
    %534 = vmatpush1.msra.mxu0 0.0
    %535 = vmatprep.subr.mxu0 0.0
    %536 = vmatpush1.msra.mxu0 0.0
    %537 = vmatprep.subr.mxu0 0.0
    %538 = vmatpush1.msra.mxu0 0.0
    %539 = vmatprep.subr.mxu0 0.0
    %540 = vmatpush1.msra.mxu0 0.0
    %541 = vmatprep.subr.mxu0 0.0
    %542 = vmatpush1.msra.mxu0 0.0
    %543 = vmatprep.subr.mxu0 0.0
    %544 = vmatpush1.msra.mxu0 0.0
    %545 = vmatprep.subr.mxu0 0.0
    %546 = vmatpush1.msra.mxu0 0.0
    %547 = vmatprep.subr.mxu0 0.0
    %548 = vmatpush1.msra.mxu0 0.0
    %549 = vmatprep.subr.mxu0 0.0
    %550 = vmatpush1.msra.mxu0 0.0
    %551 = vmatprep.subr.mxu0 0.0
    %552 = vmatpush1.msra.mxu0 0.0
    %553 = vmatprep.subr.mxu0 0.0
    %554 = vmatpush1.msra.mxu0 0.0
    %555 = vmatprep.subr.mxu0 0.0
    %556 = vmatpush1.msra.mxu0 0.0
    %557 = vmatprep.subr.mxu0 0.0
    %558 = vmatpush1.msra.mxu0 0.0
    %559 = vmatprep.subr.mxu0 0.0
    %560 = vmatpush1.msra.mxu0 0.0
    %561 = vmatprep.subr.mxu0 0.0
    %562 = vmatpush1.msra.mxu0 0.0
    %563 = vmatprep.subr.mxu0 0.0
    %564 = vmatpush1.msra.mxu0 0.0
    %565 = vmatprep.subr.mxu0 0.0
    %566 = vmatpush1.msra.mxu0 0.0
    %567 = vmatprep.subr.mxu0 0.0
    %568 = vmatpush1.msra.mxu0 0.0
    %569 = vmatprep.subr.mxu0 0.0
    %570 = vmatpush1.msra.mxu0 0.0
    %571 = vmatprep.subr.mxu0 0.0
    %572 = vmatpush1.msra.mxu0 0.0
    %573 = vmatprep.subr.mxu0 0.0
    %574 = vmatpush1.msra.mxu0 0.0
    %575 = vmatprep.mubr.f32.mxu0 0.0
    %576 = vmatmul.mubr.f32.gmra.mrb[0].mxu0 %v509
    %v577 = vpop.f32.mrb[0].mxu0
    %v578 = vadd.f32 %v506, %v577
    %v579 = vpop.f32.mrb[0].mxu0
    %580 = vdwg.mxu0
    %v581 = vmax.f32 %v578, 0.0
    %s582 = scalar_lea.vmem [#allocation7], 64
    %v583 = vld [vmem:[%s582] sm:$0xff]
    %v584 = vld [vmem:[%s582 + $0x8] sm:$0xff]
    %v585 = vld [vmem:[%s582 + $0x10] sm:$0xff]
    %v586 = vld [vmem:[%s582 + $0x18] sm:$0xff]
    %v587 = vld [vmem:[%s582 + $0x20] sm:$0xff]
    %v588 = vld [vmem:[%s582 + $0x28] sm:$0xff]
    %v589 = vld [vmem:[%s582 + $0x30] sm:$0xff]
    %v590 = vld [vmem:[%s582 + $0x38] sm:$0xff]
    %s591 = scalar_lea.vmem %s4, 1
    %v592 = vld [vmem:[%s591] sm:$0x1]
    %v594 = vlaneseq
    %v595 = vshrl.u32 %v594, 7
    %v596 = vsub.s32 0, %v595
    %v597 = vrot.slane %v592, %v596
    %v600 = vsel %vm100, %v581, 0
    %602 = vmatprep.subr.mxu0 0.0
    %603 = vmatpush1.msra.mxu0 %v583
    %604 = vmatprep.subr.mxu0 0.0
    %605 = vmatpush1.msra.mxu0 %v584
    %606 = vmatprep.subr.mxu0 0.0
    %607 = vmatpush1.msra.mxu0 %v585
    %608 = vmatprep.subr.mxu0 0.0
    %609 = vmatpush1.msra.mxu0 %v586
    %610 = vmatprep.subr.mxu0 0.0
    %611 = vmatpush1.msra.mxu0 %v587
    %612 = vmatprep.subr.mxu0 0.0
    %613 = vmatpush1.msra.mxu0 %v588
    %614 = vmatprep.subr.mxu0 0.0
    %615 = vmatpush1.msra.mxu0 %v589
    %616 = vmatprep.subr.mxu0 0.0
    %617 = vmatpush1.msra.mxu0 %v590
    %618 = vmatprep.subr.mxu0 0.0
    %619 = vmatpush1.msra.mxu0 0.0
    %620 = vmatprep.subr.mxu0 0.0
    %621 = vmatpush1.msra.mxu0 0.0
    %622 = vmatprep.subr.mxu0 0.0
    %623 = vmatpush1.msra.mxu0 0.0
    %624 = vmatprep.subr.mxu0 0.0
    %625 = vmatpush1.msra.mxu0 0.0
    %626 = vmatprep.subr.mxu0 0.0
    %627 = vmatpush1.msra.mxu0 0.0
    %628 = vmatprep.subr.mxu0 0.0
    %629 = vmatpush1.msra.mxu0 0.0
    %630 = vmatprep.subr.mxu0 0.0
    %631 = vmatpush1.msra.mxu0 0.0
    %632 = vmatprep.subr.mxu0 0.0
    %633 = vmatpush1.msra.mxu0 0.0
    %634 = vmatprep.subr.mxu0 0.0
    %635 = vmatpush1.msra.mxu0 0.0
    %636 = vmatprep.subr.mxu0 0.0
    %637 = vmatpush1.msra.mxu0 0.0
    %638 = vmatprep.subr.mxu0 0.0
    %639 = vmatpush1.msra.mxu0 0.0
    %640 = vmatprep.subr.mxu0 0.0
    %641 = vmatpush1.msra.mxu0 0.0
    %642 = vmatprep.subr.mxu0 0.0
    %643 = vmatpush1.msra.mxu0 0.0
    %644 = vmatprep.subr.mxu0 0.0
    %645 = vmatpush1.msra.mxu0 0.0
    %646 = vmatprep.subr.mxu0 0.0
    %647 = vmatpush1.msra.mxu0 0.0
    %648 = vmatprep.subr.mxu0 0.0
    %649 = vmatpush1.msra.mxu0 0.0
    %650 = vmatprep.subr.mxu0 0.0
    %651 = vmatpush1.msra.mxu0 0.0
    %652 = vmatprep.subr.mxu0 0.0
    %653 = vmatpush1.msra.mxu0 0.0
    %654 = vmatprep.subr.mxu0 0.0
    %655 = vmatpush1.msra.mxu0 0.0
    %656 = vmatprep.subr.mxu0 0.0
    %657 = vmatpush1.msra.mxu0 0.0
    %658 = vmatprep.subr.mxu0 0.0
    %659 = vmatpush1.msra.mxu0 0.0
    %660 = vmatprep.subr.mxu0 0.0
    %661 = vmatpush1.msra.mxu0 0.0
    %662 = vmatprep.subr.mxu0 0.0
    %663 = vmatpush1.msra.mxu0 0.0
    %664 = vmatprep.subr.mxu0 0.0
    %665 = vmatpush1.msra.mxu0 0.0
    %666 = vmatprep.mubr.f32.mxu0 0.0
    %667 = vmatmul.mubr.f32.gmra.mrb[0].mxu0 %v600
    %v668 = vpop.f32.mrb[0].mxu0
    %v669 = vadd.f32 %v597, %v668
    %v670 = vpop.f32.mrb[0].mxu0
    %671 = vdwg.mxu0
    %s672 = scalar_lea.vmem [#allocation8], 64
    %v673 = vld [vmem:[%s672] sm:$0xff]
    %v674 = vld [vmem:[%s672 + $0x8] sm:$0xff]
    %v675 = vld [vmem:[%s672 + $0x10] sm:$0xff]
    %v676 = vld [vmem:[%s672 + $0x18] sm:$0xff]
    %v677 = vld [vmem:[%s672 + $0x20] sm:$0xff]
    %v678 = vld [vmem:[%s672 + $0x28] sm:$0xff]
    %v679 = vld [vmem:[%s672 + $0x30] sm:$0xff]
    %v680 = vld [vmem:[%s672 + $0x38] sm:$0xff]
    %s681 = scalar_lea.vmem %s6, 1
    %v682 = vld [vmem:[%s681] sm:$0x1]
    %v684 = vlaneseq
    %v685 = vshrl.u32 %v684, 7
    %v686 = vsub.s32 0, %v685
    %v687 = vrot.slane %v682, %v686
    %689 = vrot.lane.b32.xlu0 %v581, 64
    %v690 = vpop.permute.xlu0 %689
    %v691 = vsel %vm100, %v690, 0
    %693 = vmatprep.subr.mxu0 0.0
    %694 = vmatpush1.msra.mxu0 %v673
    %695 = vmatprep.subr.mxu0 0.0
    %696 = vmatpush1.msra.mxu0 %v674
    %697 = vmatprep.subr.mxu0 0.0
    %698 = vmatpush1.msra.mxu0 %v675
    %699 = vmatprep.subr.mxu0 0.0
    %700 = vmatpush1.msra.mxu0 %v676
    %701 = vmatprep.subr.mxu0 0.0
    %702 = vmatpush1.msra.mxu0 %v677
    %703 = vmatprep.subr.mxu0 0.0
    %704 = vmatpush1.msra.mxu0 %v678
    %705 = vmatprep.subr.mxu0 0.0
    %706 = vmatpush1.msra.mxu0 %v679
    %707 = vmatprep.subr.mxu0 0.0
    %708 = vmatpush1.msra.mxu0 %v680
    %709 = vmatprep.subr.mxu0 0.0
    %710 = vmatpush1.msra.mxu0 0.0
    %711 = vmatprep.subr.mxu0 0.0
    %712 = vmatpush1.msra.mxu0 0.0
    %713 = vmatprep.subr.mxu0 0.0
    %714 = vmatpush1.msra.mxu0 0.0
    %715 = vmatprep.subr.mxu0 0.0
    %716 = vmatpush1.msra.mxu0 0.0
    %717 = vmatprep.subr.mxu0 0.0
    %718 = vmatpush1.msra.mxu0 0.0
    %719 = vmatprep.subr.mxu0 0.0
    %720 = vmatpush1.msra.mxu0 0.0
    %721 = vmatprep.subr.mxu0 0.0
    %722 = vmatpush1.msra.mxu0 0.0
    %723 = vmatprep.subr.mxu0 0.0
    %724 = vmatpush1.msra.mxu0 0.0
    %725 = vmatprep.subr.mxu0 0.0
    %726 = vmatpush1.msra.mxu0 0.0
    %727 = vmatprep.subr.mxu0 0.0
    %728 = vmatpush1.msra.mxu0 0.0
    %729 = vmatprep.subr.mxu0 0.0
    %730 = vmatpush1.msra.mxu0 0.0
    %731 = vmatprep.subr.mxu0 0.0
    %732 = vmatpush1.msra.mxu0 0.0
    %733 = vmatprep.subr.mxu0 0.0
    %734 = vmatpush1.msra.mxu0 0.0
    %735 = vmatprep.subr.mxu0 0.0
    %736 = vmatpush1.msra.mxu0 0.0
    %737 = vmatprep.subr.mxu0 0.0
    %738 = vmatpush1.msra.mxu0 0.0
    %739 = vmatprep.subr.mxu0 0.0
    %740 = vmatpush1.msra.mxu0 0.0
    %741 = vmatprep.subr.mxu0 0.0
    %742 = vmatpush1.msra.mxu0 0.0
    %743 = vmatprep.subr.mxu0 0.0
    %744 = vmatpush1.msra.mxu0 0.0
    %745 = vmatprep.subr.mxu0 0.0
    %746 = vmatpush1.msra.mxu0 0.0
    %747 = vmatprep.subr.mxu0 0.0
    %748 = vmatpush1.msra.mxu0 0.0
    %749 = vmatprep.subr.mxu0 0.0
    %750 = vmatpush1.msra.mxu0 0.0
    %751 = vmatprep.subr.mxu0 0.0
    %752 = vmatpush1.msra.mxu0 0.0
    %753 = vmatprep.subr.mxu0 0.0
    %754 = vmatpush1.msra.mxu0 0.0
    %755 = vmatprep.subr.mxu0 0.0
    %756 = vmatpush1.msra.mxu0 0.0
    %757 = vmatprep.mubr.f32.mxu0 0.0
    %758 = vmatmul.mubr.f32.gmra.mrb[0].mxu0 %v691
    %v759 = vpop.f32.mrb[0].mxu0
    %v760 = vadd.f32 %v687, %v759
    %v761 = vpop.f32.mrb[0].mxu0
    %762 = vdwg.mxu0
    %v763 = vxor.u32 %v760, 2147483648
    %v764 = vmul.f32 %v763, 1.442695
    %v765 = vpow.pop %v764
    %v766 = vadd.f32 %v765, 1.0
    %v767 = vrcp.pop %v766
    %v768 = vmul.f32 1.0, %v767
    %v769 = vmul.f32 %v768, 0.1
    %v770 = vadd.f32 %v769, 1e-06
    %v771 = vcombine.high %v83, %v83
    %v773 = vunpack.c.l.s4 1966171168
    %v774 = vunpack.c.0.s8 %v773
    %v775 = vlaneseq
    %v776 = vshrl.u32 %v775, 7
    %v777 = vsub.s32 %v774, %v776
    %v778 = vrot.slane %v83, %v777
    %v780 = vunpack.c.l.s4 1966171168
    %v781 = vunpack.c.0.s8 %v780
    %v782 = vlaneseq
    %v783 = vshrl.u32 %v782, 7
    %v784 = vsub.s32 %v781, %v783
    %v785 = vrot.slane %v771, %v784
    %v786 = vcombine.high %v778, %v778
    %v787 = vcombine.high %v785, %v785
    %v789 = vunpack.c.l.s4 1966171168
    %v790 = vunpack.c.0.s8 %v789
    %v791 = vlaneseq
    %v792 = vshrl.u32 %v791, 7
    %v793 = vsub.s32 %v790, %v792
    %v794 = vrot.slane %v778, %v793
    %v796 = vunpack.c.l.s4 1966171168
    %v797 = vunpack.c.0.s8 %v796
    %v798 = vlaneseq
    %v799 = vshrl.u32 %v798, 7
    %v800 = vsub.s32 %v797, %v799
    %v801 = vrot.slane %v785, %v800
    %v803 = vunpack.c.l.s4 1966171168
    %v804 = vunpack.c.0.s8 %v803
    %v805 = vlaneseq
    %v806 = vshrl.u32 %v805, 7
    %v807 = vsub.s32 %v804, %v806
    %v808 = vrot.slane %v786, %v807
    %v810 = vunpack.c.l.s4 1966171168
    %v811 = vunpack.c.0.s8 %v810
    %v812 = vlaneseq
    %v813 = vshrl.u32 %v812, 7
    %v814 = vsub.s32 %v811, %v813
    %v815 = vrot.slane %v787, %v814
    %v816 = vcombine.high %v794, %v794
    %v817 = vcombine.high %v801, %v801
    %v818 = vcombine.high %v808, %v808
    %v819 = vcombine.high %v815, %v815
    %v820 = vlaneseq
    %v821 = vshrl.u32 %v820, 7
    %v822 = vsub.s32 0, %v821
    %v823 = vrot.slane %v794, %v822
    %v824 = vlaneseq
    %v825 = vshrl.u32 %v824, 7
    %v826 = vsub.s32 0, %v825
    %v827 = vrot.slane %v808, %v826
    %v828 = vlaneseq
    %v829 = vshrl.u32 %v828, 7
    %v830 = vsub.s32 0, %v829
    %v831 = vrot.slane %v816, %v830
    %v832 = vlaneseq
    %v833 = vshrl.u32 %v832, 7
    %v834 = vsub.s32 0, %v833
    %v835 = vrot.slane %v818, %v834
    %v836 = vlaneseq
    %v837 = vshrl.u32 %v836, 7
    %v838 = vsub.s32 0, %v837
    %v839 = vrot.slane %v801, %v838
    %v840 = vlaneseq
    %v841 = vshrl.u32 %v840, 7
    %v842 = vsub.s32 0, %v841
    %v843 = vrot.slane %v815, %v842
    %v844 = vlaneseq
    %v845 = vshrl.u32 %v844, 7
    %v846 = vsub.s32 0, %v845
    %v847 = vrot.slane %v817, %v846
    %v848 = vlaneseq
    %v849 = vshrl.u32 %v848, 7
    %v850 = vsub.s32 0, %v849
    %v851 = vrot.slane %v819, %v850
    %v860 = vsub.f32 %v823, %v669
    %v861 = vsub.f32 %v827, %v669
    %v862 = vsub.f32 %v831, %v669
    %v863 = vsub.f32 %v835, %v669
    %v864 = vsub.f32 %v839, %v669
    %v865 = vsub.f32 %v843, %v669
    %v866 = vsub.f32 %v847, %v669
    %v867 = vsub.f32 %v851, %v669
    %v868 = vand.u32 2147483647, %v860
    %v869 = vand.u32 2147483647, %v861
    %v870 = vand.u32 2147483647, %v862
    %v871 = vand.u32 2147483647, %v863
    %v872 = vand.u32 2147483647, %v864
    %v873 = vand.u32 2147483647, %v865
    %v874 = vand.u32 2147483647, %v866
    %v875 = vand.u32 2147483647, %v867
    %v876 = vsel %vm100, %v868, 0.0
    %v877 = vsel %vm100, %v869, 0.0
    %v878 = vadd.f32 %v876, %v877
    %v879 = vsel %vm100, %v870, 0.0
    %v880 = vadd.f32 %v878, %v879
    %v881 = vsel %vm100, %v871, 0.0
    %v882 = vadd.f32 %v880, %v881
    %v883 = vsel %vm100, %v872, 0.0
    %v884 = vadd.f32 %v882, %v883
    %v885 = vsel %vm100, %v873, 0.0
    %v886 = vadd.f32 %v884, %v885
    %v887 = vsel %vm100, %v874, 0.0
    %v888 = vadd.f32 %v886, %v887
    %v889 = vsel %vm100, %v875, 0.0
    %v890 = vadd.f32 %v888, %v889
    %v891 = vmul.f32 %v890, %v481
    %v892 = vsub.f32 %v669, %v83
    %v893 = vand.u32 2147483647, %v892
    %v894 = vsub.f32 %v891, %v893
    %v895 = vrcp.pop %v770
    %v896 = vmul.f32 %v894, %v895
    %v897 = vadd.f32 %v488, %v896
    %s898 = scalar_lea.vmem [#allocation2], 24
    %v899 = vld [vmem:[%s898] sm:$0xff]
    %s900 = scalar_lea.vmem [#allocation5], 128
    %v901 = vld [vmem:[%s900] sm:$0xff]
    %v902 = vld [vmem:[%s900 + $0x8] sm:$0xff]
    %v903 = vld [vmem:[%s900 + $0x10] sm:$0xff]
    %v904 = vld [vmem:[%s900 + $0x18] sm:$0xff]
    %v905 = vld [vmem:[%s900 + $0x20] sm:$0xff]
    %v906 = vld [vmem:[%s900 + $0x28] sm:$0xff]
    %v907 = vld [vmem:[%s900 + $0x30] sm:$0xff]
    %v908 = vld [vmem:[%s900 + $0x38] sm:$0xff]
    %s909 = scalar_lea.vmem %s2, 2
    %v910 = vld [vmem:[%s909] sm:$0x1]
    %v912 = vlaneseq
    %v913 = vshrl.u32 %v912, 7
    %v914 = vsub.s32 0, %v913
    %v915 = vrot.slane %v910, %v914
    %v918 = vsel %vm100, %v899, 0
    %920 = vmatprep.subr.mxu0 0.0
    %921 = vmatpush1.msra.mxu0 %v901
    %922 = vmatprep.subr.mxu0 0.0
    %923 = vmatpush1.msra.mxu0 %v902
    %924 = vmatprep.subr.mxu0 0.0
    %925 = vmatpush1.msra.mxu0 %v903
    %926 = vmatprep.subr.mxu0 0.0
    %927 = vmatpush1.msra.mxu0 %v904
    %928 = vmatprep.subr.mxu0 0.0
    %929 = vmatpush1.msra.mxu0 %v905
    %930 = vmatprep.subr.mxu0 0.0
    %931 = vmatpush1.msra.mxu0 %v906
    %932 = vmatprep.subr.mxu0 0.0
    %933 = vmatpush1.msra.mxu0 %v907
    %934 = vmatprep.subr.mxu0 0.0
    %935 = vmatpush1.msra.mxu0 %v908
    %936 = vmatprep.subr.mxu0 0.0
    %937 = vmatpush1.msra.mxu0 0.0
    %938 = vmatprep.subr.mxu0 0.0
    %939 = vmatpush1.msra.mxu0 0.0
    %940 = vmatprep.subr.mxu0 0.0
    %941 = vmatpush1.msra.mxu0 0.0
    %942 = vmatprep.subr.mxu0 0.0
    %943 = vmatpush1.msra.mxu0 0.0
    %944 = vmatprep.subr.mxu0 0.0
    %945 = vmatpush1.msra.mxu0 0.0
    %946 = vmatprep.subr.mxu0 0.0
    %947 = vmatpush1.msra.mxu0 0.0
    %948 = vmatprep.subr.mxu0 0.0
    %949 = vmatpush1.msra.mxu0 0.0
    %950 = vmatprep.subr.mxu0 0.0
    %951 = vmatpush1.msra.mxu0 0.0
    %952 = vmatprep.subr.mxu0 0.0
    %953 = vmatpush1.msra.mxu0 0.0
    %954 = vmatprep.subr.mxu0 0.0
    %955 = vmatpush1.msra.mxu0 0.0
    %956 = vmatprep.subr.mxu0 0.0
    %957 = vmatpush1.msra.mxu0 0.0
    %958 = vmatprep.subr.mxu0 0.0
    %959 = vmatpush1.msra.mxu0 0.0
    %960 = vmatprep.subr.mxu0 0.0
    %961 = vmatpush1.msra.mxu0 0.0
    %962 = vmatprep.subr.mxu0 0.0
    %963 = vmatpush1.msra.mxu0 0.0
    %964 = vmatprep.subr.mxu0 0.0
    %965 = vmatpush1.msra.mxu0 0.0
    %966 = vmatprep.subr.mxu0 0.0
    %967 = vmatpush1.msra.mxu0 0.0
    %968 = vmatprep.subr.mxu0 0.0
    %969 = vmatpush1.msra.mxu0 0.0
    %970 = vmatprep.subr.mxu0 0.0
    %971 = vmatpush1.msra.mxu0 0.0
    %972 = vmatprep.subr.mxu0 0.0
    %973 = vmatpush1.msra.mxu0 0.0
    %974 = vmatprep.subr.mxu0 0.0
    %975 = vmatpush1.msra.mxu0 0.0
    %976 = vmatprep.subr.mxu0 0.0
    %977 = vmatpush1.msra.mxu0 0.0
    %978 = vmatprep.subr.mxu0 0.0
    %979 = vmatpush1.msra.mxu0 0.0
    %980 = vmatprep.subr.mxu0 0.0
    %981 = vmatpush1.msra.mxu0 0.0
    %982 = vmatprep.subr.mxu0 0.0
    %983 = vmatpush1.msra.mxu0 0.0
    %984 = vmatprep.mubr.f32.mxu0 0.0
    %985 = vmatmul.mubr.f32.gmra.mrb[0].mxu0 %v918
    %v986 = vpop.f32.mrb[0].mxu0
    %v987 = vadd.f32 %v915, %v986
    %v988 = vpop.f32.mrb[0].mxu0
    %989 = vdwg.mxu0
    %v990 = vmax.f32 %v987, 0.0
    %s991 = scalar_lea.vmem [#allocation7], 128
    %v992 = vld [vmem:[%s991] sm:$0xff]
    %v993 = vld [vmem:[%s991 + $0x8] sm:$0xff]
    %v994 = vld [vmem:[%s991 + $0x10] sm:$0xff]
    %v995 = vld [vmem:[%s991 + $0x18] sm:$0xff]
    %v996 = vld [vmem:[%s991 + $0x20] sm:$0xff]
    %v997 = vld [vmem:[%s991 + $0x28] sm:$0xff]
    %v998 = vld [vmem:[%s991 + $0x30] sm:$0xff]
    %v999 = vld [vmem:[%s991 + $0x38] sm:$0xff]
    %s1000 = scalar_lea.vmem %s4, 2
    %v1001 = vld [vmem:[%s1000] sm:$0x1]
    %v1003 = vlaneseq
    %v1004 = vshrl.u32 %v1003, 7
    %v1005 = vsub.s32 0, %v1004
    %v1006 = vrot.slane %v1001, %v1005
    %v1009 = vsel %vm100, %v990, 0
    %1011 = vmatprep.subr.mxu0 0.0
    %1012 = vmatpush1.msra.mxu0 %v992
    %1013 = vmatprep.subr.mxu0 0.0
    %1014 = vmatpush1.msra.mxu0 %v993
    %1015 = vmatprep.subr.mxu0 0.0
    %1016 = vmatpush1.msra.mxu0 %v994
    %1017 = vmatprep.subr.mxu0 0.0
    %1018 = vmatpush1.msra.mxu0 %v995
    %1019 = vmatprep.subr.mxu0 0.0
    %1020 = vmatpush1.msra.mxu0 %v996
    %1021 = vmatprep.subr.mxu0 0.0
    %1022 = vmatpush1.msra.mxu0 %v997
    %1023 = vmatprep.subr.mxu0 0.0
    %1024 = vmatpush1.msra.mxu0 %v998
    %1025 = vmatprep.subr.mxu0 0.0
    %1026 = vmatpush1.msra.mxu0 %v999
    %1027 = vmatprep.subr.mxu0 0.0
    %1028 = vmatpush1.msra.mxu0 0.0
    %1029 = vmatprep.subr.mxu0 0.0
    %1030 = vmatpush1.msra.mxu0 0.0
    %1031 = vmatprep.subr.mxu0 0.0
    %1032 = vmatpush1.msra.mxu0 0.0
    %1033 = vmatprep.subr.mxu0 0.0
    %1034 = vmatpush1.msra.mxu0 0.0
    %1035 = vmatprep.subr.mxu0 0.0
    %1036 = vmatpush1.msra.mxu0 0.0
    %1037 = vmatprep.subr.mxu0 0.0
    %1038 = vmatpush1.msra.mxu0 0.0
    %1039 = vmatprep.subr.mxu0 0.0
    %1040 = vmatpush1.msra.mxu0 0.0
    %1041 = vmatprep.subr.mxu0 0.0
    %1042 = vmatpush1.msra.mxu0 0.0
    %1043 = vmatprep.subr.mxu0 0.0
    %1044 = vmatpush1.msra.mxu0 0.0
    %1045 = vmatprep.subr.mxu0 0.0
    %1046 = vmatpush1.msra.mxu0 0.0
    %1047 = vmatprep.subr.mxu0 0.0
    %1048 = vmatpush1.msra.mxu0 0.0
    %1049 = vmatprep.subr.mxu0 0.0
    %1050 = vmatpush1.msra.mxu0 0.0
    %1051 = vmatprep.subr.mxu0 0.0
    %1052 = vmatpush1.msra.mxu0 0.0
    %1053 = vmatprep.subr.mxu0 0.0
    %1054 = vmatpush1.msra.mxu0 0.0
    %1055 = vmatprep.subr.mxu0 0.0
    %1056 = vmatpush1.msra.mxu0 0.0
    %1057 = vmatprep.subr.mxu0 0.0
    %1058 = vmatpush1.msra.mxu0 0.0
    %1059 = vmatprep.subr.mxu0 0.0
    %1060 = vmatpush1.msra.mxu0 0.0
    %1061 = vmatprep.subr.mxu0 0.0
    %1062 = vmatpush1.msra.mxu0 0.0
    %1063 = vmatprep.subr.mxu0 0.0
    %1064 = vmatpush1.msra.mxu0 0.0
    %1065 = vmatprep.subr.mxu0 0.0
    %1066 = vmatpush1.msra.mxu0 0.0
    %1067 = vmatprep.subr.mxu0 0.0
    %1068 = vmatpush1.msra.mxu0 0.0
    %1069 = vmatprep.subr.mxu0 0.0
    %1070 = vmatpush1.msra.mxu0 0.0
    %1071 = vmatprep.subr.mxu0 0.0
    %1072 = vmatpush1.msra.mxu0 0.0
    %1073 = vmatprep.subr.mxu0 0.0
    %1074 = vmatpush1.msra.mxu0 0.0
    %1075 = vmatprep.mubr.f32.mxu0 0.0
    %1076 = vmatmul.mubr.f32.gmra.mrb[0].mxu0 %v1009
    %v1077 = vpop.f32.mrb[0].mxu0
    %v1078 = vadd.f32 %v1006, %v1077
    %v1079 = vpop.f32.mrb[0].mxu0
    %1080 = vdwg.mxu0
    %s1081 = scalar_lea.vmem [#allocation8], 128
    %v1082 = vld [vmem:[%s1081] sm:$0xff]
    %v1083 = vld [vmem:[%s1081 + $0x8] sm:$0xff]
    %v1084 = vld [vmem:[%s1081 + $0x10] sm:$0xff]
    %v1085 = vld [vmem:[%s1081 + $0x18] sm:$0xff]
    %v1086 = vld [vmem:[%s1081 + $0x20] sm:$0xff]
    %v1087 = vld [vmem:[%s1081 + $0x28] sm:$0xff]
    %v1088 = vld [vmem:[%s1081 + $0x30] sm:$0xff]
    %v1089 = vld [vmem:[%s1081 + $0x38] sm:$0xff]
    %s1090 = scalar_lea.vmem %s6, 2
    %v1091 = vld [vmem:[%s1090] sm:$0x1]
    %v1093 = vlaneseq
    %v1094 = vshrl.u32 %v1093, 7
    %v1095 = vsub.s32 0, %v1094
    %v1096 = vrot.slane %v1091, %v1095
    %1098 = vrot.lane.b32.xlu0 %v990, 64
    %v1099 = vpop.permute.xlu0 %1098
    %v1100 = vsel %vm100, %v1099, 0
    %1102 = vmatprep.subr.mxu0 0.0
    %1103 = vmatpush1.msra.mxu0 %v1082
    %1104 = vmatprep.subr.mxu0 0.0
    %1105 = vmatpush1.msra.mxu0 %v1083
    %1106 = vmatprep.subr.mxu0 0.0
    %1107 = vmatpush1.msra.mxu0 %v1084
    %1108 = vmatprep.subr.mxu0 0.0
    %1109 = vmatpush1.msra.mxu0 %v1085
    %1110 = vmatprep.subr.mxu0 0.0
    %1111 = vmatpush1.msra.mxu0 %v1086
    %1112 = vmatprep.subr.mxu0 0.0
    %1113 = vmatpush1.msra.mxu0 %v1087
    %1114 = vmatprep.subr.mxu0 0.0
    %1115 = vmatpush1.msra.mxu0 %v1088
    %1116 = vmatprep.subr.mxu0 0.0
    %1117 = vmatpush1.msra.mxu0 %v1089
    %1118 = vmatprep.subr.mxu0 0.0
    %1119 = vmatpush1.msra.mxu0 0.0
    %1120 = vmatprep.subr.mxu0 0.0
    %1121 = vmatpush1.msra.mxu0 0.0
    %1122 = vmatprep.subr.mxu0 0.0
    %1123 = vmatpush1.msra.mxu0 0.0
    %1124 = vmatprep.subr.mxu0 0.0
    %1125 = vmatpush1.msra.mxu0 0.0
    %1126 = vmatprep.subr.mxu0 0.0
    %1127 = vmatpush1.msra.mxu0 0.0
    %1128 = vmatprep.subr.mxu0 0.0
    %1129 = vmatpush1.msra.mxu0 0.0
    %1130 = vmatprep.subr.mxu0 0.0
    %1131 = vmatpush1.msra.mxu0 0.0
    %1132 = vmatprep.subr.mxu0 0.0
    %1133 = vmatpush1.msra.mxu0 0.0
    %1134 = vmatprep.subr.mxu0 0.0
    %1135 = vmatpush1.msra.mxu0 0.0
    %1136 = vmatprep.subr.mxu0 0.0
    %1137 = vmatpush1.msra.mxu0 0.0
    %1138 = vmatprep.subr.mxu0 0.0
    %1139 = vmatpush1.msra.mxu0 0.0
    %1140 = vmatprep.subr.mxu0 0.0
    %1141 = vmatpush1.msra.mxu0 0.0
    %1142 = vmatprep.subr.mxu0 0.0
    %1143 = vmatpush1.msra.mxu0 0.0
    %1144 = vmatprep.subr.mxu0 0.0
    %1145 = vmatpush1.msra.mxu0 0.0
    %1146 = vmatprep.subr.mxu0 0.0
    %1147 = vmatpush1.msra.mxu0 0.0
    %1148 = vmatprep.subr.mxu0 0.0
    %1149 = vmatpush1.msra.mxu0 0.0
    %1150 = vmatprep.subr.mxu0 0.0
    %1151 = vmatpush1.msra.mxu0 0.0
    %1152 = vmatprep.subr.mxu0 0.0
    %1153 = vmatpush1.msra.mxu0 0.0
    %1154 = vmatprep.subr.mxu0 0.0
    %1155 = vmatpush1.msra.mxu0 0.0
    %1156 = vmatprep.subr.mxu0 0.0
    %1157 = vmatpush1.msra.mxu0 0.0
    %1158 = vmatprep.subr.mxu0 0.0
    %1159 = vmatpush1.msra.mxu0 0.0
    %1160 = vmatprep.subr.mxu0 0.0
    %1161 = vmatpush1.msra.mxu0 0.0
    %1162 = vmatprep.subr.mxu0 0.0
    %1163 = vmatpush1.msra.mxu0 0.0
    %1164 = vmatprep.subr.mxu0 0.0
    %1165 = vmatpush1.msra.mxu0 0.0
    %1166 = vmatprep.mubr.f32.mxu0 0.0
    %1167 = vmatmul.mubr.f32.gmra.mrb[0].mxu0 %v1100
    %v1168 = vpop.f32.mrb[0].mxu0
    %v1169 = vadd.f32 %v1096, %v1168
    %v1170 = vpop.f32.mrb[0].mxu0
    %1171 = vdwg.mxu0
    %v1172 = vxor.u32 %v1169, 2147483648
    %v1173 = vmul.f32 %v1172, 1.442695
    %v1174 = vpow.pop %v1173
    %v1175 = vadd.f32 %v1174, 1.0
    %v1176 = vrcp.pop %v1175
    %v1177 = vmul.f32 1.0, %v1176
    %v1178 = vmul.f32 %v1177, 0.1
    %v1179 = vadd.f32 %v1178, 1e-06
    %v1180 = vcombine.high %v490, %v490
    %v1182 = vunpack.c.l.s4 1966171168
    %v1183 = vunpack.c.0.s8 %v1182
    %v1184 = vlaneseq
    %v1185 = vshrl.u32 %v1184, 7
    %v1186 = vsub.s32 %v1183, %v1185
    %v1187 = vrot.slane %v490, %v1186
    %v1189 = vunpack.c.l.s4 1966171168
    %v1190 = vunpack.c.0.s8 %v1189
    %v1191 = vlaneseq
    %v1192 = vshrl.u32 %v1191, 7
    %v1193 = vsub.s32 %v1190, %v1192
    %v1194 = vrot.slane %v1180, %v1193
    %v1195 = vcombine.high %v1187, %v1187
    %v1196 = vcombine.high %v1194, %v1194
    %v1198 = vunpack.c.l.s4 1966171168
    %v1199 = vunpack.c.0.s8 %v1198
    %v1200 = vlaneseq
    %v1201 = vshrl.u32 %v1200, 7
    %v1202 = vsub.s32 %v1199, %v1201
    %v1203 = vrot.slane %v1187, %v1202
    %v1205 = vunpack.c.l.s4 1966171168
    %v1206 = vunpack.c.0.s8 %v1205
    %v1207 = vlaneseq
    %v1208 = vshrl.u32 %v1207, 7
    %v1209 = vsub.s32 %v1206, %v1208
    %v1210 = vrot.slane %v1194, %v1209
    %v1212 = vunpack.c.l.s4 1966171168
    %v1213 = vunpack.c.0.s8 %v1212
    %v1214 = vlaneseq
    %v1215 = vshrl.u32 %v1214, 7
    %v1216 = vsub.s32 %v1213, %v1215
    %v1217 = vrot.slane %v1195, %v1216
    %v1219 = vunpack.c.l.s4 1966171168
    %v1220 = vunpack.c.0.s8 %v1219
    %v1221 = vlaneseq
    %v1222 = vshrl.u32 %v1221, 7
    %v1223 = vsub.s32 %v1220, %v1222
    %v1224 = vrot.slane %v1196, %v1223
    %v1225 = vcombine.high %v1203, %v1203
    %v1226 = vcombine.high %v1210, %v1210
    %v1227 = vcombine.high %v1217, %v1217
    %v1228 = vcombine.high %v1224, %v1224
    %v1229 = vlaneseq
    %v1230 = vshrl.u32 %v1229, 7
    %v1231 = vsub.s32 0, %v1230
    %v1232 = vrot.slane %v1203, %v1231
    %v1233 = vlaneseq
    %v1234 = vshrl.u32 %v1233, 7
    %v1235 = vsub.s32 0, %v1234
    %v1236 = vrot.slane %v1217, %v1235
    %v1237 = vlaneseq
    %v1238 = vshrl.u32 %v1237, 7
    %v1239 = vsub.s32 0, %v1238
    %v1240 = vrot.slane %v1225, %v1239
    %v1241 = vlaneseq
    %v1242 = vshrl.u32 %v1241, 7
    %v1243 = vsub.s32 0, %v1242
    %v1244 = vrot.slane %v1227, %v1243
    %v1245 = vlaneseq
    %v1246 = vshrl.u32 %v1245, 7
    %v1247 = vsub.s32 0, %v1246
    %v1248 = vrot.slane %v1210, %v1247
    %v1249 = vlaneseq
    %v1250 = vshrl.u32 %v1249, 7
    %v1251 = vsub.s32 0, %v1250
    %v1252 = vrot.slane %v1224, %v1251
    %v1253 = vlaneseq
    %v1254 = vshrl.u32 %v1253, 7
    %v1255 = vsub.s32 0, %v1254
    %v1256 = vrot.slane %v1226, %v1255
    %v1257 = vlaneseq
    %v1258 = vshrl.u32 %v1257, 7
    %v1259 = vsub.s32 0, %v1258
    %v1260 = vrot.slane %v1228, %v1259
    %v1269 = vsub.f32 %v1232, %v1078
    %v1270 = vsub.f32 %v1236, %v1078
    %v1271 = vsub.f32 %v1240, %v1078
    %v1272 = vsub.f32 %v1244, %v1078
    %v1273 = vsub.f32 %v1248, %v1078
    %v1274 = vsub.f32 %v1252, %v1078
    %v1275 = vsub.f32 %v1256, %v1078
    %v1276 = vsub.f32 %v1260, %v1078
    %v1277 = vand.u32 2147483647, %v1269
    %v1278 = vand.u32 2147483647, %v1270
    %v1279 = vand.u32 2147483647, %v1271
    %v1280 = vand.u32 2147483647, %v1272
    %v1281 = vand.u32 2147483647, %v1273
    %v1282 = vand.u32 2147483647, %v1274
    %v1283 = vand.u32 2147483647, %v1275
    %v1284 = vand.u32 2147483647, %v1276
    %v1285 = vsel %vm100, %v1277, 0.0
    %v1286 = vsel %vm100, %v1278, 0.0
    %v1287 = vadd.f32 %v1285, %v1286
    %v1288 = vsel %vm100, %v1279, 0.0
    %v1289 = vadd.f32 %v1287, %v1288
    %v1290 = vsel %vm100, %v1280, 0.0
    %v1291 = vadd.f32 %v1289, %v1290
    %v1292 = vsel %vm100, %v1281, 0.0
    %v1293 = vadd.f32 %v1291, %v1292
    %v1294 = vsel %vm100, %v1282, 0.0
    %v1295 = vadd.f32 %v1293, %v1294
    %v1296 = vsel %vm100, %v1283, 0.0
    %v1297 = vadd.f32 %v1295, %v1296
    %v1298 = vsel %vm100, %v1284, 0.0
    %v1299 = vadd.f32 %v1297, %v1298
    %v1300 = vmul.f32 %v1299, %v481
    %v1301 = vsub.f32 %v1078, %v490
    %v1302 = vand.u32 2147483647, %v1301
    %v1303 = vsub.f32 %v1300, %v1302
    %v1304 = vrcp.pop %v1179
    %v1305 = vmul.f32 %v1303, %v1304
    %v1306 = vadd.f32 %v897, %v1305
    %v1307 = vsel %vm100, %v1306, 0.0
    %1308 = vadd.xlane.f32.xlu0 %v1307
    %v1309 = vpop.xlane.xlu0 %1308
    %v1310 = vrot.slane %v1309, 4
    %v1311 = vadd.f32 %v1309, %v1310
    %v1312 = vrot.slane %v1311, 2
    %v1313 = vadd.f32 %v1311, %v1312
    %v1314 = vrot.slane %v1313, 1
    %v1315 = vadd.f32 %v1313, %v1314
    %s1316 = vtos %v1315
    %s1317 = smul.f32 %s1316, 0.125
    %s1318 = scalar_lea.smem [#allocation10], 0
    %1319 = sst [smem:[%s1318]] %s1317
    // Predicated region
    $region46: #{tpu_custom_call.1} parent=1 // pred_check
      _
    $region47: #{tpu_custom_call.1} parent=1 // pred_check_branch
      %1321 = sbr.rel (0) target = $region49
    $region48: #{tpu_custom_call.1} parent=1 // pred_region
      %s1323 = ssub.s32 16, 16
      %1324 = vsyncadd [#allocation4], %s1323
      %1327 = dma.smem_to_hbm [#allocation10], 16, %s7, [#allocation4]
    $region49: #{tpu_custom_call.1} parent=1 // pred_fallthru
      _
    // Predicated region
    $region50: #{tpu_custom_call.1} parent=1 // pred_check
      _
    $region51: #{tpu_custom_call.1} parent=1 // pred_check_branch
      %1329 = sbr.rel (0) target = $region53
    $region52: #{tpu_custom_call.1} parent=1 // pred_region
      %1330 = dma.done [#allocation4], 16
    $region53: #{tpu_custom_call.1} parent=1 // pred_fallthru
      _
    %1331 = sfence
    %1332 = vsyncpa [#allocation3], 1
    %1333 = vsyncpa [#allocation6], 1
    %1334 = vsyncpa [#allocation9], 1
    %1335 = vsyncpa [#allocation4], 1

</llo_original>
